<compile_context>
chip_gen: v6e
topology: v6e:2x2x1
jax: 0.10.0
libtpu: 0.0.40
codegen_flags: <defaults>
</compile_context>

<pallas_src>
import jax
import jax.numpy as jnp
from jax.experimental import pallas as pl
from jax.experimental.pallas import tpu as pltpu


def lstm_kernel(x_ref, wih0_ref, whh0_ref, b0_ref,
                wih1_ref, whh1_ref, b1_ref,
                wfc_ref, bfc_ref,
                out_ref):
    H = whh0_ref.shape[0]
    L = x_ref.shape[0]

    # ---- Hoist all weight / bias loads out of the recurrence (load once). ----
    wih0 = wih0_ref[...]          # (in, 4H) bf16
    whh0 = whh0_ref[...]          # (H, 4H)  bf16
    b0 = b0_ref[...]              # (1, 4H)  f32
    wih1 = wih1_ref[...]          # (H, 4H)  bf16
    whh1 = whh1_ref[...]          # (H, 4H)  bf16
    b1 = b1_ref[...]              # (1, 4H)  f32

    # ---- Layer-0 input projection hoisted out of the recurrence: one batched
    #      (L, in) @ (in, 4H) bf16 MXU op, f32 accumulate. Kept as a vreg value. ----
    gx0 = jnp.dot(x_ref[...], wih0, preferred_element_type=jnp.float32) + b0

    def activations(gates):
        # Full-width activations over the whole (1, 4H) vreg, then slice.
        s = jax.nn.sigmoid(gates)
        t = jnp.tanh(gates)
        i = s[:, 0 * H:1 * H]
        f = s[:, 1 * H:2 * H]
        g = t[:, 2 * H:3 * H]
        o = s[:, 3 * H:4 * H]
        return i, f, g, o

    zeros_h = jnp.zeros((1, H), jnp.float32)
    h0 = c0 = h1 = c1 = zeros_h

    # ---- Fused two-layer recurrence, fully unrolled with static slices. ----
    for t in range(L):
        # Layer 0: only the recurrent matmul is on the serial chain.
        g0 = gx0[t:t + 1, :] + jnp.dot(h0.astype(jnp.bfloat16), whh0,
                                       preferred_element_type=jnp.float32)
        i0, f0, gg0, o0 = activations(g0)
        c0 = f0 * c0 + i0 * gg0
        h0 = o0 * jnp.tanh(c0)

        # Layer 1, same timestep: its input-side dot (h0 @ wih1) is off the
        # layer-1 serial chain; its recurrence overlaps layer-0's next step.
        g1 = (jnp.dot(h0.astype(jnp.bfloat16), wih1,
                      preferred_element_type=jnp.float32) + b1
              + jnp.dot(h1.astype(jnp.bfloat16), whh1,
                        preferred_element_type=jnp.float32))
        i1, f1, gg1, o1 = activations(g1)
        c1 = f1 * c1 + i1 * gg1
        h1 = o1 * jnp.tanh(c1)

    # ---- Linear head on the last timestep: VPU multiply + lane reduce. ----
    out_ref[...] = (jnp.sum(h1 * wfc_ref[...], axis=-1, keepdims=True)
                    + bfc_ref[...])


def lstm_forward(x, wih0_t, whh0_t, b0, wih1_t, whh1_t, b1, wfc_row, bfc):
    vmem = pl.BlockSpec(memory_space=pltpu.MemorySpace.VMEM)
    out = pl.pallas_call(
        lstm_kernel,
        out_shape=jax.ShapeDtypeStruct((1, 1), jnp.float32),
        in_specs=[vmem] * 9,
        out_specs=vmem,
    )(x, wih0_t, whh0_t, b0, wih1_t, whh1_t, b1, wfc_row, bfc)
    return out[0]   # shape (output_size,) == (1,)  (matches PyTorch output)


def ref_forward(x, wih0_t, whh0_t, b0, wih1_t, whh1_t, b1, wfc_row, bfc):
    """Pure-JAX f32 reference of the same math (for correctness check)."""
    H = whh0_t.shape[0]

    def cell(x_t, h, c, wih, whh, b):
        gates = x_t @ wih + h @ whh + b
        i = jax.nn.sigmoid(gates[:, :H])
        f = jax.nn.sigmoid(gates[:, H:2 * H])
        g = jnp.tanh(gates[:, 2 * H:3 * H])
        o = jax.nn.sigmoid(gates[:, 3 * H:])
        c = f * c + i * g
        h = o * jnp.tanh(c)
        return h, c

    h0 = c0 = h1 = c1 = jnp.zeros((1, H), jnp.float32)
    for t in range(x.shape[0]):
        x_t = x[t:t + 1]
        h0, c0 = cell(x_t, h0, c0, wih0_t, whh0_t, b0)
        h1, c1 = cell(h0, h1, c1, wih1_t, whh1_t, b1)
    return (jnp.sum(h1 * wfc_row, axis=-1, keepdims=True) + bfc)[0]


if __name__ == "__main__":
    # Small, deterministic synthetic configuration (module's __init__ shapes):
    seq_len = 8
    input_size = 4        # number of feature columns in the CSV
    hidden_size = 32      # small + lane-friendly (4*H = 128)
    output_size = 1
    num_layers = 2        # realized as two explicit stacked layers

    key = jax.random.PRNGKey(0)
    ks = jax.random.split(key, 12)
    k = 1.0 / jnp.sqrt(hidden_size)

    def u(key, shape, bound):
        return jax.random.uniform(key, shape, jnp.float32, -bound, bound)

    # nn.LSTM layer 0 params
    w_ih_l0 = u(ks[0], (4 * hidden_size, input_size), k)
    w_hh_l0 = u(ks[1], (4 * hidden_size, hidden_size), k)
    b_ih_l0 = u(ks[2], (4 * hidden_size,), k)
    b_hh_l0 = u(ks[3], (4 * hidden_size,), k)
    # nn.LSTM layer 1 params
    w_ih_l1 = u(ks[4], (4 * hidden_size, hidden_size), k)
    w_hh_l1 = u(ks[5], (4 * hidden_size, hidden_size), k)
    b_ih_l1 = u(ks[6], (4 * hidden_size,), k)
    b_hh_l1 = u(ks[7], (4 * hidden_size,), k)
    # nn.Linear(hidden_size, output_size)
    w_fc = u(ks[8], (output_size, hidden_size), k)
    b_fc = u(ks[9], (output_size,), k)

    # Kernel-friendly (transposed / combined) f32 forms
    wih0_t = w_ih_l0.T                                   # (input, 4H)
    whh0_t = w_hh_l0.T                                   # (H, 4H)
    b0 = (b_ih_l0 + b_hh_l0).reshape(1, 4 * hidden_size)
    wih1_t = w_ih_l1.T                                   # (H, 4H)
    whh1_t = w_hh_l1.T                                   # (H, 4H)
    b1 = (b_ih_l1 + b_hh_l1).reshape(1, 4 * hidden_size)
    wfc_row = w_fc.reshape(1, hidden_size)               # (1, H) row for VPU reduce
    bfc = b_fc.reshape(1, output_size)                   # (1, 1)

    # input_seq: (seq_len, input_size), unbatched, time-major
    x = jax.random.normal(ks[10], (seq_len, input_size), jnp.float32)

    # bf16 MXU operands for the kernel (biases / head / activations stay f32).
    bf = jnp.bfloat16
    out = lstm_forward(x.astype(bf), wih0_t.astype(bf), whh0_t.astype(bf), b0,
                       wih1_t.astype(bf), whh1_t.astype(bf), b1, wfc_row, bfc)
    out = jax.block_until_ready(out)

    ref = ref_forward(x, wih0_t, whh0_t, b0, wih1_t, whh1_t, b1, wfc_row, bfc)
    assert out.shape == (output_size,)
    # bf16 MXU operands with f32 accumulation -> loosened tolerance vs f32 ref.
    assert jnp.allclose(out, ref, atol=2e-2, rtol=2e-2), (out, ref)

    print("KERNEL_OK")
</pallas_src>

<mosaic_0001>
module attributes {stable_mosaic.version = 11 : i64} {
  func.func @lstm_kernel(%arg0: memref<8x4xbf16, #tpu.memory_space<vmem>>, %arg1: memref<4x128xbf16, #tpu.memory_space<vmem>>, %arg2: memref<32x128xbf16, #tpu.memory_space<vmem>>, %arg3: memref<1x128xf32, #tpu.memory_space<vmem>>, %arg4: memref<32x128xbf16, #tpu.memory_space<vmem>>, %arg5: memref<32x128xbf16, #tpu.memory_space<vmem>>, %arg6: memref<1x128xf32, #tpu.memory_space<vmem>>, %arg7: memref<1x32xf32, #tpu.memory_space<vmem>>, %arg8: memref<1x1xf32, #tpu.memory_space<vmem>>, %arg9: memref<1x1xf32, #tpu.memory_space<vmem>>) attributes {dimension_semantics = [], scalar_prefetch = 0 : i64, scratch_operands = 0 : i64, tpu.core_type = #tpu.core_type<tc>} {
    %c0 = arith.constant 0 : index
    %c0_0 = arith.constant 0 : index
    %0 = vector.load %arg1[%c0, %c0_0] : memref<4x128xbf16, #tpu.memory_space<vmem>>, vector<4x128xbf16>
    %c0_1 = arith.constant 0 : index
    %c0_2 = arith.constant 0 : index
    %1 = vector.load %arg2[%c0_1, %c0_2] : memref<32x128xbf16, #tpu.memory_space<vmem>>, vector<32x128xbf16>
    %c0_3 = arith.constant 0 : index
    %c0_4 = arith.constant 0 : index
    %2 = vector.load %arg3[%c0_3, %c0_4] : memref<1x128xf32, #tpu.memory_space<vmem>>, vector<1x128xf32>
    %c0_5 = arith.constant 0 : index
    %c0_6 = arith.constant 0 : index
    %3 = vector.load %arg4[%c0_5, %c0_6] : memref<32x128xbf16, #tpu.memory_space<vmem>>, vector<32x128xbf16>
    %c0_7 = arith.constant 0 : index
    %c0_8 = arith.constant 0 : index
    %4 = vector.load %arg5[%c0_7, %c0_8] : memref<32x128xbf16, #tpu.memory_space<vmem>>, vector<32x128xbf16>
    %c0_9 = arith.constant 0 : index
    %c0_10 = arith.constant 0 : index
    %5 = vector.load %arg6[%c0_9, %c0_10] : memref<1x128xf32, #tpu.memory_space<vmem>>, vector<1x128xf32>
    %c0_11 = arith.constant 0 : index
    %c0_12 = arith.constant 0 : index
    %6 = vector.load %arg0[%c0_11, %c0_12] : memref<8x4xbf16, #tpu.memory_space<vmem>>, vector<8x4xbf16>
    %cst = arith.constant dense<0.000000e+00> : vector<8x128xf32>
    %7 = tpu.matmul %6, %0, %cst {dimension_numbers = #tpu.dot_dimension_numbers<[1], [0], [0], [1], [0, 0, 1, 1], [], []>} : vector<8x4xbf16>, vector<4x128xbf16>, vector<8x128xf32> -> vector<8x128xf32>
    %8 = vector.broadcast %2 : vector<1x128xf32> to vector<8x128xf32>
    %9 = arith.addf %7, %8 : vector<8x128xf32>
    %cst_13 = arith.constant 0.000000e+00 : f32
    %10 = vector.broadcast %cst_13 : f32 to vector<1x32xf32>
    %11 = vector.extract_strided_slice %9 {offsets = [0, 0], sizes = [1, 128], strides = [1, 1]} : vector<8x128xf32> to vector<1x128xf32>
    %12 = arith.truncf %10 : vector<1x32xf32> to vector<1x32xbf16>
    %cst_14 = arith.constant dense<0.000000e+00> : vector<1x128xf32>
    %13 = tpu.matmul %12, %1, %cst_14 {dimension_numbers = #tpu.dot_dimension_numbers<[1], [0], [0], [1], [0, 0, 1, 1], [], []>} : vector<1x32xbf16>, vector<32x128xbf16>, vector<1x128xf32> -> vector<1x128xf32>
    %14 = arith.addf %11, %13 : vector<1x128xf32>
    %15 = arith.negf %14 : vector<1x128xf32>
    %16 = math.exp %15 : vector<1x128xf32>
    %cst_15 = arith.constant 1.000000e+00 : f32
    %17 = vector.broadcast %cst_15 : f32 to vector<1x128xf32>
    %18 = arith.addf %17, %16 : vector<1x128xf32>
    %19 = arith.divf %17, %18 : vector<1x128xf32>
    %20 = math.tanh %14 : vector<1x128xf32>
    %21 = vector.extract_strided_slice %19 {offsets = [0, 0], sizes = [1, 32], strides = [1, 1]} : vector<1x128xf32> to vector<1x32xf32>
    %22 = vector.extract_strided_slice %19 {offsets = [0, 32], sizes = [1, 32], strides = [1, 1]} : vector<1x128xf32> to vector<1x32xf32>
    %23 = vector.extract_strided_slice %20 {offsets = [0, 64], sizes = [1, 32], strides = [1, 1]} : vector<1x128xf32> to vector<1x32xf32>
    %24 = vector.extract_strided_slice %19 {offsets = [0, 96], sizes = [1, 32], strides = [1, 1]} : vector<1x128xf32> to vector<1x32xf32>
    %25 = arith.mulf %22, %10 : vector<1x32xf32>
    %26 = arith.mulf %21, %23 : vector<1x32xf32>
    %27 = arith.addf %25, %26 : vector<1x32xf32>
    %28 = math.tanh %27 : vector<1x32xf32>
    %29 = arith.mulf %24, %28 : vector<1x32xf32>
    %30 = arith.truncf %29 : vector<1x32xf32> to vector<1x32xbf16>
    %cst_16 = arith.constant dense<0.000000e+00> : vector<1x128xf32>
    %31 = tpu.matmul %30, %3, %cst_16 {dimension_numbers = #tpu.dot_dimension_numbers<[1], [0], [0], [1], [0, 0, 1, 1], [], []>} : vector<1x32xbf16>, vector<32x128xbf16>, vector<1x128xf32> -> vector<1x128xf32>
    %32 = arith.addf %31, %5 : vector<1x128xf32>
    %33 = arith.truncf %10 : vector<1x32xf32> to vector<1x32xbf16>
    %cst_17 = arith.constant dense<0.000000e+00> : vector<1x128xf32>
    %34 = tpu.matmul %33, %4, %cst_17 {dimension_numbers = #tpu.dot_dimension_numbers<[1], [0], [0], [1], [0, 0, 1, 1], [], []>} : vector<1x32xbf16>, vector<32x128xbf16>, vector<1x128xf32> -> vector<1x128xf32>
    %35 = arith.addf %32, %34 : vector<1x128xf32>
    %36 = arith.negf %35 : vector<1x128xf32>
    %37 = math.exp %36 : vector<1x128xf32>
    %cst_18 = arith.constant 1.000000e+00 : f32
    %38 = vector.broadcast %cst_18 : f32 to vector<1x128xf32>
    %39 = arith.addf %38, %37 : vector<1x128xf32>
    %40 = arith.divf %38, %39 : vector<1x128xf32>
    %41 = math.tanh %35 : vector<1x128xf32>
    %42 = vector.extract_strided_slice %40 {offsets = [0, 0], sizes = [1, 32], strides = [1, 1]} : vector<1x128xf32> to vector<1x32xf32>
    %43 = vector.extract_strided_slice %40 {offsets = [0, 32], sizes = [1, 32], strides = [1, 1]} : vector<1x128xf32> to vector<1x32xf32>
    %44 = vector.extract_strided_slice %41 {offsets = [0, 64], sizes = [1, 32], strides = [1, 1]} : vector<1x128xf32> to vector<1x32xf32>
    %45 = vector.extract_strided_slice %40 {offsets = [0, 96], sizes = [1, 32], strides = [1, 1]} : vector<1x128xf32> to vector<1x32xf32>
    %46 = arith.mulf %43, %10 : vector<1x32xf32>
    %47 = arith.mulf %42, %44 : vector<1x32xf32>
    %48 = arith.addf %46, %47 : vector<1x32xf32>
    %49 = math.tanh %48 : vector<1x32xf32>
    %50 = arith.mulf %45, %49 : vector<1x32xf32>
    %51 = vector.extract_strided_slice %9 {offsets = [1, 0], sizes = [1, 128], strides = [1, 1]} : vector<8x128xf32> to vector<1x128xf32>
    %52 = arith.truncf %29 : vector<1x32xf32> to vector<1x32xbf16>
    %cst_19 = arith.constant dense<0.000000e+00> : vector<1x128xf32>
    %53 = tpu.matmul %52, %1, %cst_19 {dimension_numbers = #tpu.dot_dimension_numbers<[1], [0], [0], [1], [0, 0, 1, 1], [], []>} : vector<1x32xbf16>, vector<32x128xbf16>, vector<1x128xf32> -> vector<1x128xf32>
    %54 = arith.addf %51, %53 : vector<1x128xf32>
    %55 = arith.negf %54 : vector<1x128xf32>
    %56 = math.exp %55 : vector<1x128xf32>
    %cst_20 = arith.constant 1.000000e+00 : f32
    %57 = vector.broadcast %cst_20 : f32 to vector<1x128xf32>
    %58 = arith.addf %57, %56 : vector<1x128xf32>
    %59 = arith.divf %57, %58 : vector<1x128xf32>
    %60 = math.tanh %54 : vector<1x128xf32>
    %61 = vector.extract_strided_slice %59 {offsets = [0, 0], sizes = [1, 32], strides = [1, 1]} : vector<1x128xf32> to vector<1x32xf32>
    %62 = vector.extract_strided_slice %59 {offsets = [0, 32], sizes = [1, 32], strides = [1, 1]} : vector<1x128xf32> to vector<1x32xf32>
    %63 = vector.extract_strided_slice %60 {offsets = [0, 64], sizes = [1, 32], strides = [1, 1]} : vector<1x128xf32> to vector<1x32xf32>
    %64 = vector.extract_strided_slice %59 {offsets = [0, 96], sizes = [1, 32], strides = [1, 1]} : vector<1x128xf32> to vector<1x32xf32>
    %65 = arith.mulf %62, %27 : vector<1x32xf32>
    %66 = arith.mulf %61, %63 : vector<1x32xf32>
    %67 = arith.addf %65, %66 : vector<1x32xf32>
    %68 = math.tanh %67 : vector<1x32xf32>
    %69 = arith.mulf %64, %68 : vector<1x32xf32>
    %70 = arith.truncf %69 : vector<1x32xf32> to vector<1x32xbf16>
    %cst_21 = arith.constant dense<0.000000e+00> : vector<1x128xf32>
    %71 = tpu.matmul %70, %3, %cst_21 {dimension_numbers = #tpu.dot_dimension_numbers<[1], [0], [0], [1], [0, 0, 1, 1], [], []>} : vector<1x32xbf16>, vector<32x128xbf16>, vector<1x128xf32> -> vector<1x128xf32>
    %72 = arith.addf %71, %5 : vector<1x128xf32>
    %73 = arith.truncf %50 : vector<1x32xf32> to vector<1x32xbf16>
    %cst_22 = arith.constant dense<0.000000e+00> : vector<1x128xf32>
    %74 = tpu.matmul %73, %4, %cst_22 {dimension_numbers = #tpu.dot_dimension_numbers<[1], [0], [0], [1], [0, 0, 1, 1], [], []>} : vector<1x32xbf16>, vector<32x128xbf16>, vector<1x128xf32> -> vector<1x128xf32>
    %75 = arith.addf %72, %74 : vector<1x128xf32>
    %76 = arith.negf %75 : vector<1x128xf32>
    %77 = math.exp %76 : vector<1x128xf32>
    %cst_23 = arith.constant 1.000000e+00 : f32
    %78 = vector.broadcast %cst_23 : f32 to vector<1x128xf32>
    %79 = arith.addf %78, %77 : vector<1x128xf32>
    %80 = arith.divf %78, %79 : vector<1x128xf32>
    %81 = math.tanh %75 : vector<1x128xf32>
    %82 = vector.extract_strided_slice %80 {offsets = [0, 0], sizes = [1, 32], strides = [1, 1]} : vector<1x128xf32> to vector<1x32xf32>
    %83 = vector.extract_strided_slice %80 {offsets = [0, 32], sizes = [1, 32], strides = [1, 1]} : vector<1x128xf32> to vector<1x32xf32>
    %84 = vector.extract_strided_slice %81 {offsets = [0, 64], sizes = [1, 32], strides = [1, 1]} : vector<1x128xf32> to vector<1x32xf32>
    %85 = vector.extract_strided_slice %80 {offsets = [0, 96], sizes = [1, 32], strides = [1, 1]} : vector<1x128xf32> to vector<1x32xf32>
    %86 = arith.mulf %83, %48 : vector<1x32xf32>
    %87 = arith.mulf %82, %84 : vector<1x32xf32>
    %88 = arith.addf %86, %87 : vector<1x32xf32>
    %89 = math.tanh %88 : vector<1x32xf32>
    %90 = arith.mulf %85, %89 : vector<1x32xf32>
    %91 = vector.extract_strided_slice %9 {offsets = [2, 0], sizes = [1, 128], strides = [1, 1]} : vector<8x128xf32> to vector<1x128xf32>
    %92 = arith.truncf %69 : vector<1x32xf32> to vector<1x32xbf16>
    %cst_24 = arith.constant dense<0.000000e+00> : vector<1x128xf32>
    %93 = tpu.matmul %92, %1, %cst_24 {dimension_numbers = #tpu.dot_dimension_numbers<[1], [0], [0], [1], [0, 0, 1, 1], [], []>} : vector<1x32xbf16>, vector<32x128xbf16>, vector<1x128xf32> -> vector<1x128xf32>
    %94 = arith.addf %91, %93 : vector<1x128xf32>
    %95 = arith.negf %94 : vector<1x128xf32>
    %96 = math.exp %95 : vector<1x128xf32>
    %cst_25 = arith.constant 1.000000e+00 : f32
    %97 = vector.broadcast %cst_25 : f32 to vector<1x128xf32>
    %98 = arith.addf %97, %96 : vector<1x128xf32>
    %99 = arith.divf %97, %98 : vector<1x128xf32>
    %100 = math.tanh %94 : vector<1x128xf32>
    %101 = vector.extract_strided_slice %99 {offsets = [0, 0], sizes = [1, 32], strides = [1, 1]} : vector<1x128xf32> to vector<1x32xf32>
    %102 = vector.extract_strided_slice %99 {offsets = [0, 32], sizes = [1, 32], strides = [1, 1]} : vector<1x128xf32> to vector<1x32xf32>
    %103 = vector.extract_strided_slice %100 {offsets = [0, 64], sizes = [1, 32], strides = [1, 1]} : vector<1x128xf32> to vector<1x32xf32>
    %104 = vector.extract_strided_slice %99 {offsets = [0, 96], sizes = [1, 32], strides = [1, 1]} : vector<1x128xf32> to vector<1x32xf32>
    %105 = arith.mulf %102, %67 : vector<1x32xf32>
    %106 = arith.mulf %101, %103 : vector<1x32xf32>
    %107 = arith.addf %105, %106 : vector<1x32xf32>
    %108 = math.tanh %107 : vector<1x32xf32>
    %109 = arith.mulf %104, %108 : vector<1x32xf32>
    %110 = arith.truncf %109 : vector<1x32xf32> to vector<1x32xbf16>
    %cst_26 = arith.constant dense<0.000000e+00> : vector<1x128xf32>
    %111 = tpu.matmul %110, %3, %cst_26 {dimension_numbers = #tpu.dot_dimension_numbers<[1], [0], [0], [1], [0, 0, 1, 1], [], []>} : vector<1x32xbf16>, vector<32x128xbf16>, vector<1x128xf32> -> vector<1x128xf32>
    %112 = arith.addf %111, %5 : vector<1x128xf32>
    %113 = arith.truncf %90 : vector<1x32xf32> to vector<1x32xbf16>
    %cst_27 = arith.constant dense<0.000000e+00> : vector<1x128xf32>
    %114 = tpu.matmul %113, %4, %cst_27 {dimension_numbers = #tpu.dot_dimension_numbers<[1], [0], [0], [1], [0, 0, 1, 1], [], []>} : vector<1x32xbf16>, vector<32x128xbf16>, vector<1x128xf32> -> vector<1x128xf32>
    %115 = arith.addf %112, %114 : vector<1x128xf32>
    %116 = arith.negf %115 : vector<1x128xf32>
    %117 = math.exp %116 : vector<1x128xf32>
    %cst_28 = arith.constant 1.000000e+00 : f32
    %118 = vector.broadcast %cst_28 : f32 to vector<1x128xf32>
    %119 = arith.addf %118, %117 : vector<1x128xf32>
    %120 = arith.divf %118, %119 : vector<1x128xf32>
    %121 = math.tanh %115 : vector<1x128xf32>
    %122 = vector.extract_strided_slice %120 {offsets = [0, 0], sizes = [1, 32], strides = [1, 1]} : vector<1x128xf32> to vector<1x32xf32>
    %123 = vector.extract_strided_slice %120 {offsets = [0, 32], sizes = [1, 32], strides = [1, 1]} : vector<1x128xf32> to vector<1x32xf32>
    %124 = vector.extract_strided_slice %121 {offsets = [0, 64], sizes = [1, 32], strides = [1, 1]} : vector<1x128xf32> to vector<1x32xf32>
    %125 = vector.extract_strided_slice %120 {offsets = [0, 96], sizes = [1, 32], strides = [1, 1]} : vector<1x128xf32> to vector<1x32xf32>
    %126 = arith.mulf %123, %88 : vector<1x32xf32>
    %127 = arith.mulf %122, %124 : vector<1x32xf32>
    %128 = arith.addf %126, %127 : vector<1x32xf32>
    %129 = math.tanh %128 : vector<1x32xf32>
    %130 = arith.mulf %125, %129 : vector<1x32xf32>
    %131 = vector.extract_strided_slice %9 {offsets = [3, 0], sizes = [1, 128], strides = [1, 1]} : vector<8x128xf32> to vector<1x128xf32>
    %132 = arith.truncf %109 : vector<1x32xf32> to vector<1x32xbf16>
    %cst_29 = arith.constant dense<0.000000e+00> : vector<1x128xf32>
    %133 = tpu.matmul %132, %1, %cst_29 {dimension_numbers = #tpu.dot_dimension_numbers<[1], [0], [0], [1], [0, 0, 1, 1], [], []>} : vector<1x32xbf16>, vector<32x128xbf16>, vector<1x128xf32> -> vector<1x128xf32>
    %134 = arith.addf %131, %133 : vector<1x128xf32>
    %135 = arith.negf %134 : vector<1x128xf32>
    %136 = math.exp %135 : vector<1x128xf32>
    %cst_30 = arith.constant 1.000000e+00 : f32
    %137 = vector.broadcast %cst_30 : f32 to vector<1x128xf32>
    %138 = arith.addf %137, %136 : vector<1x128xf32>
    %139 = arith.divf %137, %138 : vector<1x128xf32>
    %140 = math.tanh %134 : vector<1x128xf32>
    %141 = vector.extract_strided_slice %139 {offsets = [0, 0], sizes = [1, 32], strides = [1, 1]} : vector<1x128xf32> to vector<1x32xf32>
    %142 = vector.extract_strided_slice %139 {offsets = [0, 32], sizes = [1, 32], strides = [1, 1]} : vector<1x128xf32> to vector<1x32xf32>
    %143 = vector.extract_strided_slice %140 {offsets = [0, 64], sizes = [1, 32], strides = [1, 1]} : vector<1x128xf32> to vector<1x32xf32>
    %144 = vector.extract_strided_slice %139 {offsets = [0, 96], sizes = [1, 32], strides = [1, 1]} : vector<1x128xf32> to vector<1x32xf32>
    %145 = arith.mulf %142, %107 : vector<1x32xf32>
    %146 = arith.mulf %141, %143 : vector<1x32xf32>
    %147 = arith.addf %145, %146 : vector<1x32xf32>
    %148 = math.tanh %147 : vector<1x32xf32>
    %149 = arith.mulf %144, %148 : vector<1x32xf32>
    %150 = arith.truncf %149 : vector<1x32xf32> to vector<1x32xbf16>
    %cst_31 = arith.constant dense<0.000000e+00> : vector<1x128xf32>
    %151 = tpu.matmul %150, %3, %cst_31 {dimension_numbers = #tpu.dot_dimension_numbers<[1], [0], [0], [1], [0, 0, 1, 1], [], []>} : vector<1x32xbf16>, vector<32x128xbf16>, vector<1x128xf32> -> vector<1x128xf32>
    %152 = arith.addf %151, %5 : vector<1x128xf32>
    %153 = arith.truncf %130 : vector<1x32xf32> to vector<1x32xbf16>
    %cst_32 = arith.constant dense<0.000000e+00> : vector<1x128xf32>
    %154 = tpu.matmul %153, %4, %cst_32 {dimension_numbers = #tpu.dot_dimension_numbers<[1], [0], [0], [1], [0, 0, 1, 1], [], []>} : vector<1x32xbf16>, vector<32x128xbf16>, vector<1x128xf32> -> vector<1x128xf32>
    %155 = arith.addf %152, %154 : vector<1x128xf32>
    %156 = arith.negf %155 : vector<1x128xf32>
    %157 = math.exp %156 : vector<1x128xf32>
    %cst_33 = arith.constant 1.000000e+00 : f32
    %158 = vector.broadcast %cst_33 : f32 to vector<1x128xf32>
    %159 = arith.addf %158, %157 : vector<1x128xf32>
    %160 = arith.divf %158, %159 : vector<1x128xf32>
    %161 = math.tanh %155 : vector<1x128xf32>
    %162 = vector.extract_strided_slice %160 {offsets = [0, 0], sizes = [1, 32], strides = [1, 1]} : vector<1x128xf32> to vector<1x32xf32>
    %163 = vector.extract_strided_slice %160 {offsets = [0, 32], sizes = [1, 32], strides = [1, 1]} : vector<1x128xf32> to vector<1x32xf32>
    %164 = vector.extract_strided_slice %161 {offsets = [0, 64], sizes = [1, 32], strides = [1, 1]} : vector<1x128xf32> to vector<1x32xf32>
    %165 = vector.extract_strided_slice %160 {offsets = [0, 96], sizes = [1, 32], strides = [1, 1]} : vector<1x128xf32> to vector<1x32xf32>
    %166 = arith.mulf %163, %128 : vector<1x32xf32>
    %167 = arith.mulf %162, %164 : vector<1x32xf32>
    %168 = arith.addf %166, %167 : vector<1x32xf32>
    %169 = math.tanh %168 : vector<1x32xf32>
    %170 = arith.mulf %165, %169 : vector<1x32xf32>
    %171 = vector.extract_strided_slice %9 {offsets = [4, 0], sizes = [1, 128], strides = [1, 1]} : vector<8x128xf32> to vector<1x128xf32>
    %172 = arith.truncf %149 : vector<1x32xf32> to vector<1x32xbf16>
    %cst_34 = arith.constant dense<0.000000e+00> : vector<1x128xf32>
    %173 = tpu.matmul %172, %1, %cst_34 {dimension_numbers = #tpu.dot_dimension_numbers<[1], [0], [0], [1], [0, 0, 1, 1], [], []>} : vector<1x32xbf16>, vector<32x128xbf16>, vector<1x128xf32> -> vector<1x128xf32>
    %174 = arith.addf %171, %173 : vector<1x128xf32>
    %175 = arith.negf %174 : vector<1x128xf32>
    %176 = math.exp %175 : vector<1x128xf32>
    %cst_35 = arith.constant 1.000000e+00 : f32
    %177 = vector.broadcast %cst_35 : f32 to vector<1x128xf32>
    %178 = arith.addf %177, %176 : vector<1x128xf32>
    %179 = arith.divf %177, %178 : vector<1x128xf32>
    %180 = math.tanh %174 : vector<1x128xf32>
    %181 = vector.extract_strided_slice %179 {offsets = [0, 0], sizes = [1, 32], strides = [1, 1]} : vector<1x128xf32> to vector<1x32xf32>
    %182 = vector.extract_strided_slice %179 {offsets = [0, 32], sizes = [1, 32], strides = [1, 1]} : vector<1x128xf32> to vector<1x32xf32>
    %183 = vector.extract_strided_slice %180 {offsets = [0, 64], sizes = [1, 32], strides = [1, 1]} : vector<1x128xf32> to vector<1x32xf32>
    %184 = vector.extract_strided_slice %179 {offsets = [0, 96], sizes = [1, 32], strides = [1, 1]} : vector<1x128xf32> to vector<1x32xf32>
    %185 = arith.mulf %182, %147 : vector<1x32xf32>
    %186 = arith.mulf %181, %183 : vector<1x32xf32>
    %187 = arith.addf %185, %186 : vector<1x32xf32>
    %188 = math.tanh %187 : vector<1x32xf32>
    %189 = arith.mulf %184, %188 : vector<1x32xf32>
    %190 = arith.truncf %189 : vector<1x32xf32> to vector<1x32xbf16>
    %cst_36 = arith.constant dense<0.000000e+00> : vector<1x128xf32>
    %191 = tpu.matmul %190, %3, %cst_36 {dimension_numbers = #tpu.dot_dimension_numbers<[1], [0], [0], [1], [0, 0, 1, 1], [], []>} : vector<1x32xbf16>, vector<32x128xbf16>, vector<1x128xf32> -> vector<1x128xf32>
    %192 = arith.addf %191, %5 : vector<1x128xf32>
    %193 = arith.truncf %170 : vector<1x32xf32> to vector<1x32xbf16>
    %cst_37 = arith.constant dense<0.000000e+00> : vector<1x128xf32>
    %194 = tpu.matmul %193, %4, %cst_37 {dimension_numbers = #tpu.dot_dimension_numbers<[1], [0], [0], [1], [0, 0, 1, 1], [], []>} : vector<1x32xbf16>, vector<32x128xbf16>, vector<1x128xf32> -> vector<1x128xf32>
    %195 = arith.addf %192, %194 : vector<1x128xf32>
    %196 = arith.negf %195 : vector<1x128xf32>
    %197 = math.exp %196 : vector<1x128xf32>
    %cst_38 = arith.constant 1.000000e+00 : f32
    %198 = vector.broadcast %cst_38 : f32 to vector<1x128xf32>
    %199 = arith.addf %198, %197 : vector<1x128xf32>
    %200 = arith.divf %198, %199 : vector<1x128xf32>
    %201 = math.tanh %195 : vector<1x128xf32>
    %202 = vector.extract_strided_slice %200 {offsets = [0, 0], sizes = [1, 32], strides = [1, 1]} : vector<1x128xf32> to vector<1x32xf32>
    %203 = vector.extract_strided_slice %200 {offsets = [0, 32], sizes = [1, 32], strides = [1, 1]} : vector<1x128xf32> to vector<1x32xf32>
    %204 = vector.extract_strided_slice %201 {offsets = [0, 64], sizes = [1, 32], strides = [1, 1]} : vector<1x128xf32> to vector<1x32xf32>
    %205 = vector.extract_strided_slice %200 {offsets = [0, 96], sizes = [1, 32], strides = [1, 1]} : vector<1x128xf32> to vector<1x32xf32>
    %206 = arith.mulf %203, %168 : vector<1x32xf32>
    %207 = arith.mulf %202, %204 : vector<1x32xf32>
    %208 = arith.addf %206, %207 : vector<1x32xf32>
    %209 = math.tanh %208 : vector<1x32xf32>
    %210 = arith.mulf %205, %209 : vector<1x32xf32>
    %211 = vector.extract_strided_slice %9 {offsets = [5, 0], sizes = [1, 128], strides = [1, 1]} : vector<8x128xf32> to vector<1x128xf32>
    %212 = arith.truncf %189 : vector<1x32xf32> to vector<1x32xbf16>
    %cst_39 = arith.constant dense<0.000000e+00> : vector<1x128xf32>
    %213 = tpu.matmul %212, %1, %cst_39 {dimension_numbers = #tpu.dot_dimension_numbers<[1], [0], [0], [1], [0, 0, 1, 1], [], []>} : vector<1x32xbf16>, vector<32x128xbf16>, vector<1x128xf32> -> vector<1x128xf32>
    %214 = arith.addf %211, %213 : vector<1x128xf32>
    %215 = arith.negf %214 : vector<1x128xf32>
    %216 = math.exp %215 : vector<1x128xf32>
    %cst_40 = arith.constant 1.000000e+00 : f32
    %217 = vector.broadcast %cst_40 : f32 to vector<1x128xf32>
    %218 = arith.addf %217, %216 : vector<1x128xf32>
    %219 = arith.divf %217, %218 : vector<1x128xf32>
    %220 = math.tanh %214 : vector<1x128xf32>
    %221 = vector.extract_strided_slice %219 {offsets = [0, 0], sizes = [1, 32], strides = [1, 1]} : vector<1x128xf32> to vector<1x32xf32>
    %222 = vector.extract_strided_slice %219 {offsets = [0, 32], sizes = [1, 32], strides = [1, 1]} : vector<1x128xf32> to vector<1x32xf32>
    %223 = vector.extract_strided_slice %220 {offsets = [0, 64], sizes = [1, 32], strides = [1, 1]} : vector<1x128xf32> to vector<1x32xf32>
    %224 = vector.extract_strided_slice %219 {offsets = [0, 96], sizes = [1, 32], strides = [1, 1]} : vector<1x128xf32> to vector<1x32xf32>
    %225 = arith.mulf %222, %187 : vector<1x32xf32>
    %226 = arith.mulf %221, %223 : vector<1x32xf32>
    %227 = arith.addf %225, %226 : vector<1x32xf32>
    %228 = math.tanh %227 : vector<1x32xf32>
    %229 = arith.mulf %224, %228 : vector<1x32xf32>
    %230 = arith.truncf %229 : vector<1x32xf32> to vector<1x32xbf16>
    %cst_41 = arith.constant dense<0.000000e+00> : vector<1x128xf32>
    %231 = tpu.matmul %230, %3, %cst_41 {dimension_numbers = #tpu.dot_dimension_numbers<[1], [0], [0], [1], [0, 0, 1, 1], [], []>} : vector<1x32xbf16>, vector<32x128xbf16>, vector<1x128xf32> -> vector<1x128xf32>
    %232 = arith.addf %231, %5 : vector<1x128xf32>
    %233 = arith.truncf %210 : vector<1x32xf32> to vector<1x32xbf16>
    %cst_42 = arith.constant dense<0.000000e+00> : vector<1x128xf32>
    %234 = tpu.matmul %233, %4, %cst_42 {dimension_numbers = #tpu.dot_dimension_numbers<[1], [0], [0], [1], [0, 0, 1, 1], [], []>} : vector<1x32xbf16>, vector<32x128xbf16>, vector<1x128xf32> -> vector<1x128xf32>
    %235 = arith.addf %232, %234 : vector<1x128xf32>
    %236 = arith.negf %235 : vector<1x128xf32>
    %237 = math.exp %236 : vector<1x128xf32>
    %cst_43 = arith.constant 1.000000e+00 : f32
    %238 = vector.broadcast %cst_43 : f32 to vector<1x128xf32>
    %239 = arith.addf %238, %237 : vector<1x128xf32>
    %240 = arith.divf %238, %239 : vector<1x128xf32>
    %241 = math.tanh %235 : vector<1x128xf32>
    %242 = vector.extract_strided_slice %240 {offsets = [0, 0], sizes = [1, 32], strides = [1, 1]} : vector<1x128xf32> to vector<1x32xf32>
    %243 = vector.extract_strided_slice %240 {offsets = [0, 32], sizes = [1, 32], strides = [1, 1]} : vector<1x128xf32> to vector<1x32xf32>
    %244 = vector.extract_strided_slice %241 {offsets = [0, 64], sizes = [1, 32], strides = [1, 1]} : vector<1x128xf32> to vector<1x32xf32>
    %245 = vector.extract_strided_slice %240 {offsets = [0, 96], sizes = [1, 32], strides = [1, 1]} : vector<1x128xf32> to vector<1x32xf32>
    %246 = arith.mulf %243, %208 : vector<1x32xf32>
    %247 = arith.mulf %242, %244 : vector<1x32xf32>
    %248 = arith.addf %246, %247 : vector<1x32xf32>
    %249 = math.tanh %248 : vector<1x32xf32>
    %250 = arith.mulf %245, %249 : vector<1x32xf32>
    %251 = vector.extract_strided_slice %9 {offsets = [6, 0], sizes = [1, 128], strides = [1, 1]} : vector<8x128xf32> to vector<1x128xf32>
    %252 = arith.truncf %229 : vector<1x32xf32> to vector<1x32xbf16>
    %cst_44 = arith.constant dense<0.000000e+00> : vector<1x128xf32>
    %253 = tpu.matmul %252, %1, %cst_44 {dimension_numbers = #tpu.dot_dimension_numbers<[1], [0], [0], [1], [0, 0, 1, 1], [], []>} : vector<1x32xbf16>, vector<32x128xbf16>, vector<1x128xf32> -> vector<1x128xf32>
    %254 = arith.addf %251, %253 : vector<1x128xf32>
    %255 = arith.negf %254 : vector<1x128xf32>
    %256 = math.exp %255 : vector<1x128xf32>
    %cst_45 = arith.constant 1.000000e+00 : f32
    %257 = vector.broadcast %cst_45 : f32 to vector<1x128xf32>
    %258 = arith.addf %257, %256 : vector<1x128xf32>
    %259 = arith.divf %257, %258 : vector<1x128xf32>
    %260 = math.tanh %254 : vector<1x128xf32>
    %261 = vector.extract_strided_slice %259 {offsets = [0, 0], sizes = [1, 32], strides = [1, 1]} : vector<1x128xf32> to vector<1x32xf32>
    %262 = vector.extract_strided_slice %259 {offsets = [0, 32], sizes = [1, 32], strides = [1, 1]} : vector<1x128xf32> to vector<1x32xf32>
    %263 = vector.extract_strided_slice %260 {offsets = [0, 64], sizes = [1, 32], strides = [1, 1]} : vector<1x128xf32> to vector<1x32xf32>
    %264 = vector.extract_strided_slice %259 {offsets = [0, 96], sizes = [1, 32], strides = [1, 1]} : vector<1x128xf32> to vector<1x32xf32>
    %265 = arith.mulf %262, %227 : vector<1x32xf32>
    %266 = arith.mulf %261, %263 : vector<1x32xf32>
    %267 = arith.addf %265, %266 : vector<1x32xf32>
    %268 = math.tanh %267 : vector<1x32xf32>
    %269 = arith.mulf %264, %268 : vector<1x32xf32>
    %270 = arith.truncf %269 : vector<1x32xf32> to vector<1x32xbf16>
    %cst_46 = arith.constant dense<0.000000e+00> : vector<1x128xf32>
    %271 = tpu.matmul %270, %3, %cst_46 {dimension_numbers = #tpu.dot_dimension_numbers<[1], [0], [0], [1], [0, 0, 1, 1], [], []>} : vector<1x32xbf16>, vector<32x128xbf16>, vector<1x128xf32> -> vector<1x128xf32>
    %272 = arith.addf %271, %5 : vector<1x128xf32>
    %273 = arith.truncf %250 : vector<1x32xf32> to vector<1x32xbf16>
    %cst_47 = arith.constant dense<0.000000e+00> : vector<1x128xf32>
    %274 = tpu.matmul %273, %4, %cst_47 {dimension_numbers = #tpu.dot_dimension_numbers<[1], [0], [0], [1], [0, 0, 1, 1], [], []>} : vector<1x32xbf16>, vector<32x128xbf16>, vector<1x128xf32> -> vector<1x128xf32>
    %275 = arith.addf %272, %274 : vector<1x128xf32>
    %276 = arith.negf %275 : vector<1x128xf32>
    %277 = math.exp %276 : vector<1x128xf32>
    %cst_48 = arith.constant 1.000000e+00 : f32
    %278 = vector.broadcast %cst_48 : f32 to vector<1x128xf32>
    %279 = arith.addf %278, %277 : vector<1x128xf32>
    %280 = arith.divf %278, %279 : vector<1x128xf32>
    %281 = math.tanh %275 : vector<1x128xf32>
    %282 = vector.extract_strided_slice %280 {offsets = [0, 0], sizes = [1, 32], strides = [1, 1]} : vector<1x128xf32> to vector<1x32xf32>
    %283 = vector.extract_strided_slice %280 {offsets = [0, 32], sizes = [1, 32], strides = [1, 1]} : vector<1x128xf32> to vector<1x32xf32>
    %284 = vector.extract_strided_slice %281 {offsets = [0, 64], sizes = [1, 32], strides = [1, 1]} : vector<1x128xf32> to vector<1x32xf32>
    %285 = vector.extract_strided_slice %280 {offsets = [0, 96], sizes = [1, 32], strides = [1, 1]} : vector<1x128xf32> to vector<1x32xf32>
    %286 = arith.mulf %283, %248 : vector<1x32xf32>
    %287 = arith.mulf %282, %284 : vector<1x32xf32>
    %288 = arith.addf %286, %287 : vector<1x32xf32>
    %289 = math.tanh %288 : vector<1x32xf32>
    %290 = arith.mulf %285, %289 : vector<1x32xf32>
    %291 = vector.extract_strided_slice %9 {offsets = [7, 0], sizes = [1, 128], strides = [1, 1]} : vector<8x128xf32> to vector<1x128xf32>
    %292 = arith.truncf %269 : vector<1x32xf32> to vector<1x32xbf16>
    %cst_49 = arith.constant dense<0.000000e+00> : vector<1x128xf32>
    %293 = tpu.matmul %292, %1, %cst_49 {dimension_numbers = #tpu.dot_dimension_numbers<[1], [0], [0], [1], [0, 0, 1, 1], [], []>} : vector<1x32xbf16>, vector<32x128xbf16>, vector<1x128xf32> -> vector<1x128xf32>
    %294 = arith.addf %291, %293 : vector<1x128xf32>
    %295 = arith.negf %294 : vector<1x128xf32>
    %296 = math.exp %295 : vector<1x128xf32>
    %cst_50 = arith.constant 1.000000e+00 : f32
    %297 = vector.broadcast %cst_50 : f32 to vector<1x128xf32>
    %298 = arith.addf %297, %296 : vector<1x128xf32>
    %299 = arith.divf %297, %298 : vector<1x128xf32>
    %300 = math.tanh %294 : vector<1x128xf32>
    %301 = vector.extract_strided_slice %299 {offsets = [0, 0], sizes = [1, 32], strides = [1, 1]} : vector<1x128xf32> to vector<1x32xf32>
    %302 = vector.extract_strided_slice %299 {offsets = [0, 32], sizes = [1, 32], strides = [1, 1]} : vector<1x128xf32> to vector<1x32xf32>
    %303 = vector.extract_strided_slice %300 {offsets = [0, 64], sizes = [1, 32], strides = [1, 1]} : vector<1x128xf32> to vector<1x32xf32>
    %304 = vector.extract_strided_slice %299 {offsets = [0, 96], sizes = [1, 32], strides = [1, 1]} : vector<1x128xf32> to vector<1x32xf32>
    %305 = arith.mulf %302, %267 : vector<1x32xf32>
    %306 = arith.mulf %301, %303 : vector<1x32xf32>
    %307 = arith.addf %305, %306 : vector<1x32xf32>
    %308 = math.tanh %307 : vector<1x32xf32>
    %309 = arith.mulf %304, %308 : vector<1x32xf32>
    %310 = arith.truncf %309 : vector<1x32xf32> to vector<1x32xbf16>
    %cst_51 = arith.constant dense<0.000000e+00> : vector<1x128xf32>
    %311 = tpu.matmul %310, %3, %cst_51 {dimension_numbers = #tpu.dot_dimension_numbers<[1], [0], [0], [1], [0, 0, 1, 1], [], []>} : vector<1x32xbf16>, vector<32x128xbf16>, vector<1x128xf32> -> vector<1x128xf32>
    %312 = arith.addf %311, %5 : vector<1x128xf32>
    %313 = arith.truncf %290 : vector<1x32xf32> to vector<1x32xbf16>
    %cst_52 = arith.constant dense<0.000000e+00> : vector<1x128xf32>
    %314 = tpu.matmul %313, %4, %cst_52 {dimension_numbers = #tpu.dot_dimension_numbers<[1], [0], [0], [1], [0, 0, 1, 1], [], []>} : vector<1x32xbf16>, vector<32x128xbf16>, vector<1x128xf32> -> vector<1x128xf32>
    %315 = arith.addf %312, %314 : vector<1x128xf32>
    %316 = arith.negf %315 : vector<1x128xf32>
    %317 = math.exp %316 : vector<1x128xf32>
    %cst_53 = arith.constant 1.000000e+00 : f32
    %318 = vector.broadcast %cst_53 : f32 to vector<1x128xf32>
    %319 = arith.addf %318, %317 : vector<1x128xf32>
    %320 = arith.divf %318, %319 : vector<1x128xf32>
    %321 = math.tanh %315 : vector<1x128xf32>
    %322 = vector.extract_strided_slice %320 {offsets = [0, 0], sizes = [1, 32], strides = [1, 1]} : vector<1x128xf32> to vector<1x32xf32>
    %323 = vector.extract_strided_slice %320 {offsets = [0, 32], sizes = [1, 32], strides = [1, 1]} : vector<1x128xf32> to vector<1x32xf32>
    %324 = vector.extract_strided_slice %321 {offsets = [0, 64], sizes = [1, 32], strides = [1, 1]} : vector<1x128xf32> to vector<1x32xf32>
    %325 = vector.extract_strided_slice %320 {offsets = [0, 96], sizes = [1, 32], strides = [1, 1]} : vector<1x128xf32> to vector<1x32xf32>
    %326 = arith.mulf %323, %288 : vector<1x32xf32>
    %327 = arith.mulf %322, %324 : vector<1x32xf32>
    %328 = arith.addf %326, %327 : vector<1x32xf32>
    %329 = math.tanh %328 : vector<1x32xf32>
    %330 = arith.mulf %325, %329 : vector<1x32xf32>
    %c0_54 = arith.constant 0 : index
    %c0_55 = arith.constant 0 : index
    %331 = vector.load %arg7[%c0_54, %c0_55] : memref<1x32xf32, #tpu.memory_space<vmem>>, vector<1x32xf32>
    %332 = arith.mulf %330, %331 : vector<1x32xf32>
    %cst_56 = arith.constant dense<0.000000e+00> : vector<1xf32>
    %333 = vector.multi_reduction <add>, %332, %cst_56 [1] : vector<1x32xf32> to vector<1xf32>
    %334 = vector.shape_cast %333 : vector<1xf32> to vector<1x1xf32>
    %c0_57 = arith.constant 0 : index
    %c0_58 = arith.constant 0 : index
    %335 = vector.load %arg8[%c0_57, %c0_58] : memref<1x1xf32, #tpu.memory_space<vmem>>, vector<1x1xf32>
    %336 = arith.addf %334, %335 : vector<1x1xf32>
    %c0_59 = arith.constant 0 : index
    %c0_60 = arith.constant 0 : index
    %337 = vector.load %arg9[%c0_59, %c0_60] : memref<1x1xf32, #tpu.memory_space<vmem>>, vector<1x1xf32>
    tpu.vector_store %arg9[%c0_59, %c0_60], %336 {strides = array<i32>} : memref<1x1xf32, #tpu.memory_space<vmem>>, vector<1x1xf32>,
    return
  }
}

</mosaic_0001>

<llo_original>
// kernel: tpu_custom_call.1
$region0: #{tpu_custom_call.1}
  #allocation0 [shape = 'u32[]', space=smem, size = 0x4, offset = 0x4, fixed_abs, tag = 'smem constant byte address 0x4 - core index']
  #allocation1 [shape = 'u32[144,128]{1,0:T(1,128)}', space=vmem, size = 0x12000, scoped, tag = 'internal scratch']
  #allocation2 [shape = 'f32[1,1]{1,0:T(1,128)S(1)}', space=vmem, size = 0x200, scoped, tag = 'scoped memory for tpu_custom_call.1']
  %s0 = inlined_call_operand.vmem [shape: bf16[8,4], index: 0, kind: input, shape index: {}]
  %s1 = inlined_call_operand.hbm [shape: bf16[4,128], index: 1, kind: input, shape index: {}]
  %s2 = inlined_call_operand.hbm [shape: bf16[32,128], index: 2, kind: input, shape index: {}]
  %s3 = inlined_call_operand.vmem [shape: f32[1,128], index: 3, kind: input, shape index: {}]
  %s4 = inlined_call_operand.hbm [shape: bf16[32,128], index: 4, kind: input, shape index: {}]
  %s5 = inlined_call_operand.vmem [shape: bf16[32,128], index: 5, kind: input, shape index: {}]
  %s6 = inlined_call_operand.vmem [shape: f32[1,128], index: 6, kind: input, shape index: {}]
  %s7 = inlined_call_operand.vmem [shape: f32[1,32], index: 7, kind: input, shape index: {}]
  %s8 = inlined_call_operand.<no memory space> [shape: f32[1,1], index: 8, kind: input, shape index: {}]
  %s9 = inlined_call_operand.hbm [shape: f32[1,1], index: 9, kind: output, shape index: {}]
  %s10 = sld [smem:[#allocation0]]
  $region58: #{tpu_custom_call.1} parent=0
    _
  %s12 = ssub.s32 1, %s10
  %s13 = scalar_select 0, %s12, %s10
  %v14 = vstv %s8
  %15 = vst [vmem:[#allocation2] sm:$0x1] %v14
  $region1: #{tpu_custom_call.1} parent=0
    #allocation3 [shape = 'u8[1024]{0}', space=vmem, size = 0x400, scoped, tag = 'input window, operand 1, single buffered']
    #allocation4 [shape = 's32[1]{0}', space=sflag, size = 0x4, scoped, tag = 'scoped memory for tpu_custom_call.1']
    #allocation5 [shape = 's32[1]{0}', space=sflag, size = 0x4, scoped, tag = 'scoped memory for tpu_custom_call.1']
    #allocation6 [shape = 'u8[8192]{0}', space=vmem, size = 0x2000, scoped, tag = 'input window, operand 2, single buffered']
    #allocation7 [shape = 's32[1]{0}', space=sflag, size = 0x4, scoped, tag = 'scoped memory for tpu_custom_call.1']
    #allocation8 [shape = 'u8[8192]{0}', space=vmem, size = 0x2000, scoped, tag = 'input window, operand 4, single buffered']
    #allocation9 [shape = 'u8[512]{0}', space=vmem, size = 0x400, scoped, tag = 'output window, operand 0, single buffered']
    %16 = vsyncpa [#allocation4], 0
    %17 = vsyncpa [#allocation7], 0
    %18 = vsyncpa [#allocation5], 0
    // Predicated region
    $region2: #{tpu_custom_call.1} parent=1 // pred_check
      _
    $region3: #{tpu_custom_call.1} parent=1 // pred_check_branch
      %20 = sbr.rel (0) target = $region5
    $region4: #{tpu_custom_call.1} parent=1 // pred_region
      _
    $region5: #{tpu_custom_call.1} parent=1 // pred_fallthru
      _
    // Predicated region
    $region6: #{tpu_custom_call.1} parent=1 // pred_check
      _
    $region7: #{tpu_custom_call.1} parent=1 // pred_check_branch
      %22 = sbr.rel (0) target = $region9
    $region8: #{tpu_custom_call.1} parent=1 // pred_region
      %s24 = ssub.s32 32, 32
      %25 = vsyncadd [#allocation4], %s24
      %s27 = sshll.u32 [#allocation3], 4
      %s28 = int_to_ptr.vmem [resolvable:$true] %s27
      %30 = dma.hbm_to_vmem [thread:$0]  %s1, 32, %s28, [#allocation4]
    $region9: #{tpu_custom_call.1} parent=1 // pred_fallthru
      _
    // Predicated region
    $region10: #{tpu_custom_call.1} parent=1 // pred_check
      _
    $region11: #{tpu_custom_call.1} parent=1 // pred_check_branch
      %32 = sbr.rel (0) target = $region13
    $region12: #{tpu_custom_call.1} parent=1 // pred_region
      %s34 = ssub.s32 256, 256
      %35 = vsyncadd [#allocation7], %s34
      %s36 = sshll.u32 [#allocation6], 4
      %s37 = int_to_ptr.vmem [resolvable:$true] %s36
      %42 = dma.hbm_to_vmem [thread:$0]  %s2, 256, %s37, [#allocation7], 64, 64, 4
    $region13: #{tpu_custom_call.1} parent=1 // pred_fallthru
      _
    // Predicated region
    $region14: #{tpu_custom_call.1} parent=1 // pred_check
      _
    $region15: #{tpu_custom_call.1} parent=1 // pred_check_branch
      %44 = sbr.rel (0) target = $region17
    $region16: #{tpu_custom_call.1} parent=1 // pred_region
      _
    $region17: #{tpu_custom_call.1} parent=1 // pred_fallthru
      _
    // Predicated region
    $region18: #{tpu_custom_call.1} parent=1 // pred_check
      _
    $region19: #{tpu_custom_call.1} parent=1 // pred_check_branch
      %46 = sbr.rel (0) target = $region21
    $region20: #{tpu_custom_call.1} parent=1 // pred_region
      %s48 = ssub.s32 256, 256
      %49 = vsyncadd [#allocation7], %s48
      %s50 = sshll.u32 [#allocation8], 4
      %s51 = int_to_ptr.vmem [resolvable:$true] %s50
      %56 = dma.hbm_to_vmem [thread:$0]  %s4, 256, %s51, [#allocation7], 64, 64, 4
    $region21: #{tpu_custom_call.1} parent=1 // pred_fallthru
      _
    // Predicated region
    $region22: #{tpu_custom_call.1} parent=1 // pred_check
      _
    $region23: #{tpu_custom_call.1} parent=1 // pred_check_branch
      %58 = sbr.rel (0) target = $region25
    $region24: #{tpu_custom_call.1} parent=1 // pred_region
      _
    $region25: #{tpu_custom_call.1} parent=1 // pred_fallthru
      _
    // Predicated region
    $region26: #{tpu_custom_call.1} parent=1 // pred_check
      _
    $region27: #{tpu_custom_call.1} parent=1 // pred_check_branch
      %60 = sbr.rel (0) target = $region29
    $region28: #{tpu_custom_call.1} parent=1 // pred_region
      _
    $region29: #{tpu_custom_call.1} parent=1 // pred_fallthru
      _
    // Predicated region
    $region30: #{tpu_custom_call.1} parent=1 // pred_check
      _
    $region31: #{tpu_custom_call.1} parent=1 // pred_check_branch
      %62 = sbr.rel (0) target = $region33
    $region32: #{tpu_custom_call.1} parent=1 // pred_region
      _
    $region33: #{tpu_custom_call.1} parent=1 // pred_fallthru
      _
    // Predicated region
    $region34: #{tpu_custom_call.1} parent=1 // pred_check
      _
    $region35: #{tpu_custom_call.1} parent=1 // pred_check_branch
      %64 = sbr.rel (0) target = $region37
    $region36: #{tpu_custom_call.1} parent=1 // pred_region
      _
    $region37: #{tpu_custom_call.1} parent=1 // pred_fallthru
      _
    // Predicated region
    $region38: #{tpu_custom_call.1} parent=1 // pred_check
      _
    $region39: #{tpu_custom_call.1} parent=1 // pred_check_branch
      %66 = sbr.rel (0) target = $region41
    $region40: #{tpu_custom_call.1} parent=1 // pred_region
      %67 = dma.done [#allocation4], 32
    $region41: #{tpu_custom_call.1} parent=1 // pred_fallthru
      _
    // Predicated region
    $region42: #{tpu_custom_call.1} parent=1 // pred_check
      _
    $region43: #{tpu_custom_call.1} parent=1 // pred_check_branch
      %69 = sbr.rel (0) target = $region45
    $region44: #{tpu_custom_call.1} parent=1 // pred_region
      %70 = dma.done [#allocation7], 256
    $region45: #{tpu_custom_call.1} parent=1 // pred_fallthru
      _
    // Predicated region
    $region46: #{tpu_custom_call.1} parent=1 // pred_check
      _
    $region47: #{tpu_custom_call.1} parent=1 // pred_check_branch
      %72 = sbr.rel (0) target = $region49
    $region48: #{tpu_custom_call.1} parent=1 // pred_region
      %73 = dma.done [#allocation7], 256
    $region49: #{tpu_custom_call.1} parent=1 // pred_fallthru
      _
    %v75 = vld [vmem:[#allocation3] sm:$0x3]
    %v76 = vld [vmem:[#allocation6] sm:$0xf]
    %v77 = vld [vmem:[#allocation6 + $0x4] sm:$0xf]
    %v78 = vld [vmem:[#allocation6 + $0x8] sm:$0xf]
    %v79 = vld [vmem:[#allocation6 + $0xc] sm:$0xf]
    %v80 = vld [vmem:[%s3] sm:$0x1]
    %v81 = vld [vmem:[#allocation8] sm:$0xf]
    %v82 = vld [vmem:[#allocation8 + $0x4] sm:$0xf]
    %v83 = vld [vmem:[#allocation8 + $0x8] sm:$0xf]
    %v84 = vld [vmem:[#allocation8 + $0xc] sm:$0xf]
    %v85 = vld [vmem:[%s5] sm:$0xf]
    %v86 = vld [vmem:[%s5 + $0x4] sm:$0xf]
    %v87 = vld [vmem:[%s5 + $0x8] sm:$0xf]
    %v88 = vld [vmem:[%s5 + $0xc] sm:$0xf]
    %v89 = vld [vmem:[%s6] sm:$0x1]
    %v90 = vld [vmem:[%s0] sm:$0xf]
    %v92 = vlaneseq
    %v93 = vshrl.u32 %v92, 7
    %v94 = vsub.s32 0, %v93
    %v95 = vrot.slane %v80, %v94
    %vm97 = vcmask 31744
    %v99 = vsel %vm97, %v90, 0
    %vm101 = vcmask 1041408
    %v103 = vsel %vm101, %v75, 0
    %105 = vmatprep.subr.bf16.mxu0 0
    %106 = vmatpush1.bf16.msra.mxu0 0
    %107 = vmatprep.subr.bf16.mxu0 0
    %108 = vmatpush1.bf16.msra.mxu0 0
    %109 = vmatprep.subr.bf16.mxu0 0
    %110 = vmatpush1.bf16.msra.mxu0 0
    %111 = vmatprep.subr.bf16.mxu0 0
    %112 = vmatpush1.bf16.msra.mxu0 0
    %113 = vmatprep.subr.bf16.mxu0 0
    %114 = vmatpush1.bf16.msra.mxu0 0
    %115 = vmatprep.subr.bf16.mxu0 0
    %116 = vmatpush1.bf16.msra.mxu0 0
    %117 = vmatprep.subr.bf16.mxu0 0
    %118 = vmatpush1.bf16.msra.mxu0 0
    %119 = vmatprep.subr.bf16.mxu0 0
    %120 = vmatpush1.bf16.msra.mxu0 %v103
    %121 = vmatprep.subr.bf16.mxu0 0
    %122 = vmatpush2.bf16.msra.mxu0 0
    %123 = vmatprep.subr.bf16.mxu0 0
    %124 = vmatpush2.bf16.msra.mxu0 0
    %125 = vmatprep.subr.bf16.mxu0 0
    %126 = vmatpush2.bf16.msra.mxu0 0
    %127 = vmatprep.subr.bf16.mxu0 0
    %128 = vmatpush2.bf16.msra.mxu0 0
    %129 = vmatprep.subr.bf16.mxu0 0
    %130 = vmatpush2.bf16.msra.mxu0 0
    %131 = vmatprep.subr.bf16.mxu0 0
    %132 = vmatpush2.bf16.msra.mxu0 0
    %133 = vmatprep.subr.bf16.mxu0 0
    %134 = vmatpush2.bf16.msra.mxu0 0
    %135 = vmatprep.subr.bf16.mxu0 0
    %136 = vmatpush2.bf16.msra.mxu0 0
    %137 = vmatprep.mubr.bf16.mxu0 0
    %138 = vmatmul.mubr.bf16.gmra.mxu0 %v99
    %v139 = vpop.f32.mrf.mxu0
    %v140 = vadd.f32 %v95, %v139
    %v141 = vpop.f32.mrf.mxu0
    %v142 = vpop.f32.mrf.mxu0
    %v143 = vpop.f32.mrf.mxu0
    %144 = vdwg.mxu0
    %v149 = vunpack.c.l.b16 %v76
    %v150 = vunpack.c.l.b16 %v77
    %v151 = vunpack.c.l.b16 %v78
    %v152 = vunpack.c.l.b16 %v79
    %v153 = vpack.c.b16 %v150, %v149
    %v154 = vpack.c.b16 %v152, %v151
    %vm157 = vcmask 261120
    %v159 = vsel %vm157, 0, 0
    %161 = vmatprep.subr.bf16.mxu0 0
    %162 = vmatpush1.bf16.msra.mxu0 0
    %163 = vmatprep.subr.bf16.mxu0 0
    %164 = vmatpush1.bf16.msra.mxu0 0
    %165 = vmatprep.subr.bf16.mxu0 0
    %166 = vmatpush1.bf16.msra.mxu0 0
    %167 = vmatprep.subr.bf16.mxu0 0
    %168 = vmatpush1.bf16.msra.mxu0 0
    %169 = vmatprep.subr.bf16.mxu0 0
    %170 = vmatpush1.bf16.msra.mxu0 0
    %171 = vmatprep.subr.bf16.mxu0 0
    %172 = vmatpush1.bf16.msra.mxu0 0
    %173 = vmatprep.subr.bf16.mxu0 0
    %174 = vmatpush1.bf16.msra.mxu0 %v154
    %175 = vmatprep.subr.bf16.mxu0 0
    %176 = vmatpush1.bf16.msra.mxu0 %v153
    %177 = vmatprep.subr.bf16.mxu0 0
    %178 = vmatpush2.bf16.msra.mxu0 0
    %179 = vmatprep.subr.bf16.mxu0 0
    %180 = vmatpush2.bf16.msra.mxu0 0
    %181 = vmatprep.subr.bf16.mxu0 0
    %182 = vmatpush2.bf16.msra.mxu0 0
    %183 = vmatprep.subr.bf16.mxu0 0
    %184 = vmatpush2.bf16.msra.mxu0 0
    %185 = vmatprep.subr.bf16.mxu0 0
    %186 = vmatpush2.bf16.msra.mxu0 0
    %187 = vmatprep.subr.bf16.mxu0 0
    %188 = vmatpush2.bf16.msra.mxu0 0
    %189 = vmatprep.subr.bf16.mxu0 0
    %190 = vmatpush2.bf16.msra.mxu0 0
    %191 = vmatprep.subr.bf16.mxu0 0
    %192 = vmatpush2.bf16.msra.mxu0 0
    %193 = vmatprep.mubr.bf16.mxu0 0
    %194 = vmatmul.mubr.bf16.gmra.mxu0 %v159
    %v195 = vpop.f32.mrf.mxu0
    %v196 = vadd.f32 0.0, %v195
    %v197 = vpop.f32.mrf.mxu0
    %v198 = vpop.f32.mrf.mxu0
    %v199 = vpop.f32.mrf.mxu0
    %200 = vdwg.mxu0
    %v201 = vadd.f32 %v140, %v196
    %v202 = vxor.u32 %v201, 2147483648
    %v203 = vmul.f32 %v202, 1.442695
    %v204 = vpow.pop %v203
    %v205 = vadd.f32 %v204, 1.0
    %v206 = vrcp.pop %v205
    %v207 = vmul.f32 1.0, %v206
    %v208 = vtanh.pop %v201
    %v209 = vmul.f32 %v207, 0.0
    %211 = vrot.lane.b32.xlu0 %v208, 64
    %v212 = vpop.permute.xlu0 %211
    %v214 = vmul.f32 %v207, %v212
    %216 = vrot.lane.b32.xlu0 %v214, 32
    %v217 = vpop.permute.xlu0 %216
    %v219 = vadd.f32 %v209, %v217
    %v220 = vtanh.pop %v219
    %222 = vrot.lane.b32.xlu0 %v220, 64
    %v223 = vpop.permute.xlu0 %222
    %v225 = vmul.f32 %v207, %v223
    %v226 = vpack.c.bf16 %v225, %v225
    %228 = vrot.lane.b32.xlu0 %v226, 32
    %v229 = vpop.permute.xlu0 %228
    %v234 = vunpack.c.l.b16 %v81
    %v235 = vunpack.c.l.b16 %v82
    %v236 = vunpack.c.l.b16 %v83
    %v237 = vunpack.c.l.b16 %v84
    %v238 = vpack.c.b16 %v235, %v234
    %v239 = vpack.c.b16 %v237, %v236
    %v243 = vsel %vm157, %v229, 0
    %245 = vmatprep.subr.bf16.mxu0 0
    %246 = vmatpush1.bf16.msra.mxu0 0
    %247 = vmatprep.subr.bf16.mxu0 0
    %248 = vmatpush1.bf16.msra.mxu0 0
    %249 = vmatprep.subr.bf16.mxu0 0
    %250 = vmatpush1.bf16.msra.mxu0 0
    %251 = vmatprep.subr.bf16.mxu0 0
    %252 = vmatpush1.bf16.msra.mxu0 0
    %253 = vmatprep.subr.bf16.mxu0 0
    %254 = vmatpush1.bf16.msra.mxu0 0
    %255 = vmatprep.subr.bf16.mxu0 0
    %256 = vmatpush1.bf16.msra.mxu0 0
    %257 = vmatprep.subr.bf16.mxu0 0
    %258 = vmatpush1.bf16.msra.mxu0 %v239
    %259 = vmatprep.subr.bf16.mxu0 0
    %260 = vmatpush1.bf16.msra.mxu0 %v238
    %261 = vmatprep.subr.bf16.mxu0 0
    %262 = vmatpush2.bf16.msra.mxu0 0
    %263 = vmatprep.subr.bf16.mxu0 0
    %264 = vmatpush2.bf16.msra.mxu0 0
    %265 = vmatprep.subr.bf16.mxu0 0
    %266 = vmatpush2.bf16.msra.mxu0 0
    %267 = vmatprep.subr.bf16.mxu0 0
    %268 = vmatpush2.bf16.msra.mxu0 0
    %269 = vmatprep.subr.bf16.mxu0 0
    %270 = vmatpush2.bf16.msra.mxu0 0
    %271 = vmatprep.subr.bf16.mxu0 0
    %272 = vmatpush2.bf16.msra.mxu0 0
    %273 = vmatprep.subr.bf16.mxu0 0
    %274 = vmatpush2.bf16.msra.mxu0 0
    %275 = vmatprep.subr.bf16.mxu0 0
    %276 = vmatpush2.bf16.msra.mxu0 0
    %277 = vmatprep.mubr.bf16.mxu0 0
    %278 = vmatmul.mubr.bf16.gmra.mxu0 %v243
    %v279 = vpop.f32.mrf.mxu0
    %v280 = vadd.f32 %v89, %v279
    %v281 = vpop.f32.mrf.mxu0
    %v282 = vpop.f32.mrf.mxu0
    %v283 = vpop.f32.mrf.mxu0
    %284 = vdwg.mxu0
    %v289 = vunpack.c.l.b16 %v85
    %v290 = vunpack.c.l.b16 %v86
    %v291 = vunpack.c.l.b16 %v87
    %v292 = vunpack.c.l.b16 %v88
    %v293 = vpack.c.b16 %v290, %v289
    %v294 = vpack.c.b16 %v292, %v291
    %297 = vmatprep.subr.bf16.mxu0 0
    %298 = vmatpush1.bf16.msra.mxu0 0
    %299 = vmatprep.subr.bf16.mxu0 0
    %300 = vmatpush1.bf16.msra.mxu0 0
    %301 = vmatprep.subr.bf16.mxu0 0
    %302 = vmatpush1.bf16.msra.mxu0 0
    %303 = vmatprep.subr.bf16.mxu0 0
    %304 = vmatpush1.bf16.msra.mxu0 0
    %305 = vmatprep.subr.bf16.mxu0 0
    %306 = vmatpush1.bf16.msra.mxu0 0
    %307 = vmatprep.subr.bf16.mxu0 0
    %308 = vmatpush1.bf16.msra.mxu0 0
    %309 = vmatprep.subr.bf16.mxu0 0
    %310 = vmatpush1.bf16.msra.mxu0 %v294
    %311 = vmatprep.subr.bf16.mxu0 0
    %312 = vmatpush1.bf16.msra.mxu0 %v293
    %313 = vmatprep.subr.bf16.mxu0 0
    %314 = vmatpush2.bf16.msra.mxu0 0
    %315 = vmatprep.subr.bf16.mxu0 0
    %316 = vmatpush2.bf16.msra.mxu0 0
    %317 = vmatprep.subr.bf16.mxu0 0
    %318 = vmatpush2.bf16.msra.mxu0 0
    %319 = vmatprep.subr.bf16.mxu0 0
    %320 = vmatpush2.bf16.msra.mxu0 0
    %321 = vmatprep.subr.bf16.mxu0 0
    %322 = vmatpush2.bf16.msra.mxu0 0
    %323 = vmatprep.subr.bf16.mxu0 0
    %324 = vmatpush2.bf16.msra.mxu0 0
    %325 = vmatprep.subr.bf16.mxu0 0
    %326 = vmatpush2.bf16.msra.mxu0 0
    %327 = vmatprep.subr.bf16.mxu0 0
    %328 = vmatpush2.bf16.msra.mxu0 0
    %329 = vmatprep.mubr.bf16.mxu0 0
    %330 = vmatmul.mubr.bf16.gmra.mxu0 %v159
    %v331 = vpop.f32.mrf.mxu0
    %v332 = vadd.f32 0.0, %v331
    %v333 = vpop.f32.mrf.mxu0
    %v334 = vpop.f32.mrf.mxu0
    %v335 = vpop.f32.mrf.mxu0
    %336 = vdwg.mxu0
    %v337 = vadd.f32 %v280, %v332
    %v338 = vxor.u32 %v337, 2147483648
    %v339 = vmul.f32 %v338, 1.442695
    %v340 = vpow.pop %v339
    %v341 = vadd.f32 %v340, 1.0
    %v342 = vrcp.pop %v341
    %v343 = vmul.f32 1.0, %v342
    %v344 = vtanh.pop %v337
    %v345 = vmul.f32 %v343, 0.0
    %347 = vrot.lane.b32.xlu0 %v344, 64
    %v348 = vpop.permute.xlu0 %347
    %v350 = vmul.f32 %v343, %v348
    %352 = vrot.lane.b32.xlu0 %v350, 32
    %v353 = vpop.permute.xlu0 %352
    %v355 = vadd.f32 %v345, %v353
    %v356 = vtanh.pop %v355
    %358 = vrot.lane.b32.xlu0 %v356, 64
    %v359 = vpop.permute.xlu0 %358
    %v361 = vmul.f32 %v343, %v359
    %362 = vmatprep.subr.bf16.mxu0 0
    %363 = vmatpush1.bf16.msra.mxu0 0
    %364 = vmatprep.subr.bf16.mxu0 0
    %365 = vmatpush1.bf16.msra.mxu0 0
    %366 = vmatprep.subr.bf16.mxu0 0
    %367 = vmatpush1.bf16.msra.mxu0 0
    %368 = vmatprep.subr.bf16.mxu0 0
    %369 = vmatpush1.bf16.msra.mxu0 0
    %370 = vmatprep.subr.bf16.mxu0 0
    %371 = vmatpush1.bf16.msra.mxu0 0
    %372 = vmatprep.subr.bf16.mxu0 0
    %373 = vmatpush1.bf16.msra.mxu0 0
    %374 = vmatprep.subr.bf16.mxu0 0
    %375 = vmatpush1.bf16.msra.mxu0 %v154
    %376 = vmatprep.subr.bf16.mxu0 0
    %377 = vmatpush1.bf16.msra.mxu0 %v153
    %378 = vmatprep.subr.bf16.mxu0 0
    %379 = vmatpush2.bf16.msra.mxu0 0
    %380 = vmatprep.subr.bf16.mxu0 0
    %381 = vmatpush2.bf16.msra.mxu0 0
    %382 = vmatprep.subr.bf16.mxu0 0
    %383 = vmatpush2.bf16.msra.mxu0 0
    %384 = vmatprep.subr.bf16.mxu0 0
    %385 = vmatpush2.bf16.msra.mxu0 0
    %386 = vmatprep.subr.bf16.mxu0 0
    %387 = vmatpush2.bf16.msra.mxu0 0
    %388 = vmatprep.subr.bf16.mxu0 0
    %389 = vmatpush2.bf16.msra.mxu0 0
    %390 = vmatprep.subr.bf16.mxu0 0
    %391 = vmatpush2.bf16.msra.mxu0 0
    %392 = vmatprep.subr.bf16.mxu0 0
    %393 = vmatpush2.bf16.msra.mxu0 0
    %394 = vmatprep.mubr.bf16.mxu0 0
    %395 = vmatmul.mubr.bf16.gmra.mxu0 %v243
    %v396 = vpop.f32.mrf.mxu0
    %v397 = vadd.f32 0.0, %v396
    %v398 = vpop.f32.mrf.mxu0
    %v399 = vpop.f32.mrf.mxu0
    %v400 = vpop.f32.mrf.mxu0
    %401 = vdwg.mxu0
    %v403 = vrot.slane %v397, 7
    %v405 = vadd.f32 %v140, %v403
    %v406 = vxor.u32 %v405, 2147483648
    %v407 = vmul.f32 %v406, 1.442695
    %v408 = vpow.pop %v407
    %v409 = vadd.f32 %v408, 1.0
    %v410 = vrcp.pop %v409
    %v411 = vmul.f32 1.0, %v410
    %v412 = vtanh.pop %v405
    %v414 = vrot.slane %v219, 7
    %v416 = vmul.f32 %v411, %v414
    %418 = vrot.lane.b32.xlu0 %v412, 64
    %v419 = vpop.permute.xlu0 %418
    %v421 = vmul.f32 %v411, %v419
    %423 = vrot.lane.b32.xlu0 %v421, 32
    %v424 = vpop.permute.xlu0 %423
    %v426 = vadd.f32 %v416, %v424
    %v427 = vtanh.pop %v426
    %429 = vrot.lane.b32.xlu0 %v427, 64
    %v430 = vpop.permute.xlu0 %429
    %v432 = vmul.f32 %v411, %v430
    %v433 = vpack.c.bf16 %v432, %v432
    %v435 = vshrl.u32 %v433, 16
    %437 = vrot.lane.b32.xlu0 %v435, 32
    %v438 = vpop.permute.xlu0 %437
    %v440 = vsel %vm157, %v438, 0
    %442 = vmatprep.subr.bf16.mxu0 0
    %443 = vmatpush1.bf16.msra.mxu0 0
    %444 = vmatprep.subr.bf16.mxu0 0
    %445 = vmatpush1.bf16.msra.mxu0 0
    %446 = vmatprep.subr.bf16.mxu0 0
    %447 = vmatpush1.bf16.msra.mxu0 0
    %448 = vmatprep.subr.bf16.mxu0 0
    %449 = vmatpush1.bf16.msra.mxu0 0
    %450 = vmatprep.subr.bf16.mxu0 0
    %451 = vmatpush1.bf16.msra.mxu0 0
    %452 = vmatprep.subr.bf16.mxu0 0
    %453 = vmatpush1.bf16.msra.mxu0 0
    %454 = vmatprep.subr.bf16.mxu0 0
    %455 = vmatpush1.bf16.msra.mxu0 %v239
    %456 = vmatprep.subr.bf16.mxu0 0
    %457 = vmatpush1.bf16.msra.mxu0 %v238
    %458 = vmatprep.subr.bf16.mxu0 0
    %459 = vmatpush2.bf16.msra.mxu0 0
    %460 = vmatprep.subr.bf16.mxu0 0
    %461 = vmatpush2.bf16.msra.mxu0 0
    %462 = vmatprep.subr.bf16.mxu0 0
    %463 = vmatpush2.bf16.msra.mxu0 0
    %464 = vmatprep.subr.bf16.mxu0 0
    %465 = vmatpush2.bf16.msra.mxu0 0
    %466 = vmatprep.subr.bf16.mxu0 0
    %467 = vmatpush2.bf16.msra.mxu0 0
    %468 = vmatprep.subr.bf16.mxu0 0
    %469 = vmatpush2.bf16.msra.mxu0 0
    %470 = vmatprep.subr.bf16.mxu0 0
    %471 = vmatpush2.bf16.msra.mxu0 0
    %472 = vmatprep.subr.bf16.mxu0 0
    %473 = vmatpush2.bf16.msra.mxu0 0
    %474 = vmatprep.mubr.bf16.mxu0 0
    %475 = vmatmul.mubr.bf16.gmra.mxu0 %v440
    %v476 = vpop.f32.mrf.mxu0
    %v477 = vadd.f32 %v89, %v476
    %v478 = vpop.f32.mrf.mxu0
    %v479 = vpop.f32.mrf.mxu0
    %v480 = vpop.f32.mrf.mxu0
    %481 = vdwg.mxu0
    %v482 = vpack.c.bf16 %v361, %v361
    %484 = vrot.lane.b32.xlu0 %v482, 32
    %v485 = vpop.permute.xlu0 %484
    %v487 = vsel %vm157, %v485, 0
    %489 = vmatprep.subr.bf16.mxu0 0
    %490 = vmatpush1.bf16.msra.mxu0 0
    %491 = vmatprep.subr.bf16.mxu0 0
    %492 = vmatpush1.bf16.msra.mxu0 0
    %493 = vmatprep.subr.bf16.mxu0 0
    %494 = vmatpush1.bf16.msra.mxu0 0
    %495 = vmatprep.subr.bf16.mxu0 0
    %496 = vmatpush1.bf16.msra.mxu0 0
    %497 = vmatprep.subr.bf16.mxu0 0
    %498 = vmatpush1.bf16.msra.mxu0 0
    %499 = vmatprep.subr.bf16.mxu0 0
    %500 = vmatpush1.bf16.msra.mxu0 0
    %501 = vmatprep.subr.bf16.mxu0 0
    %502 = vmatpush1.bf16.msra.mxu0 %v294
    %503 = vmatprep.subr.bf16.mxu0 0
    %504 = vmatpush1.bf16.msra.mxu0 %v293
    %505 = vmatprep.subr.bf16.mxu0 0
    %506 = vmatpush2.bf16.msra.mxu0 0
    %507 = vmatprep.subr.bf16.mxu0 0
    %508 = vmatpush2.bf16.msra.mxu0 0
    %509 = vmatprep.subr.bf16.mxu0 0
    %510 = vmatpush2.bf16.msra.mxu0 0
    %511 = vmatprep.subr.bf16.mxu0 0
    %512 = vmatpush2.bf16.msra.mxu0 0
    %513 = vmatprep.subr.bf16.mxu0 0
    %514 = vmatpush2.bf16.msra.mxu0 0
    %515 = vmatprep.subr.bf16.mxu0 0
    %516 = vmatpush2.bf16.msra.mxu0 0
    %517 = vmatprep.subr.bf16.mxu0 0
    %518 = vmatpush2.bf16.msra.mxu0 0
    %519 = vmatprep.subr.bf16.mxu0 0
    %520 = vmatpush2.bf16.msra.mxu0 0
    %521 = vmatprep.mubr.bf16.mxu0 0
    %522 = vmatmul.mubr.bf16.gmra.mxu0 %v487
    %v523 = vpop.f32.mrf.mxu0
    %v524 = vadd.f32 0.0, %v523
    %v525 = vpop.f32.mrf.mxu0
    %v526 = vpop.f32.mrf.mxu0
    %v527 = vpop.f32.mrf.mxu0
    %528 = vdwg.mxu0
    %v529 = vadd.f32 %v477, %v524
    %v530 = vxor.u32 %v529, 2147483648
    %v531 = vmul.f32 %v530, 1.442695
    %v532 = vpow.pop %v531
    %v533 = vadd.f32 %v532, 1.0
    %v534 = vrcp.pop %v533
    %v535 = vmul.f32 1.0, %v534
    %v536 = vtanh.pop %v529
    %v537 = vmul.f32 %v535, %v355
    %539 = vrot.lane.b32.xlu0 %v536, 64
    %v540 = vpop.permute.xlu0 %539
    %v542 = vmul.f32 %v535, %v540
    %544 = vrot.lane.b32.xlu0 %v542, 32
    %v545 = vpop.permute.xlu0 %544
    %v547 = vadd.f32 %v537, %v545
    %v548 = vtanh.pop %v547
    %550 = vrot.lane.b32.xlu0 %v548, 64
    %v551 = vpop.permute.xlu0 %550
    %v553 = vmul.f32 %v535, %v551
    %554 = vmatprep.subr.bf16.mxu0 0
    %555 = vmatpush1.bf16.msra.mxu0 0
    %556 = vmatprep.subr.bf16.mxu0 0
    %557 = vmatpush1.bf16.msra.mxu0 0
    %558 = vmatprep.subr.bf16.mxu0 0
    %559 = vmatpush1.bf16.msra.mxu0 0
    %560 = vmatprep.subr.bf16.mxu0 0
    %561 = vmatpush1.bf16.msra.mxu0 0
    %562 = vmatprep.subr.bf16.mxu0 0
    %563 = vmatpush1.bf16.msra.mxu0 0
    %564 = vmatprep.subr.bf16.mxu0 0
    %565 = vmatpush1.bf16.msra.mxu0 0
    %566 = vmatprep.subr.bf16.mxu0 0
    %567 = vmatpush1.bf16.msra.mxu0 %v154
    %568 = vmatprep.subr.bf16.mxu0 0
    %569 = vmatpush1.bf16.msra.mxu0 %v153
    %570 = vmatprep.subr.bf16.mxu0 0
    %571 = vmatpush2.bf16.msra.mxu0 0
    %572 = vmatprep.subr.bf16.mxu0 0
    %573 = vmatpush2.bf16.msra.mxu0 0
    %574 = vmatprep.subr.bf16.mxu0 0
    %575 = vmatpush2.bf16.msra.mxu0 0
    %576 = vmatprep.subr.bf16.mxu0 0
    %577 = vmatpush2.bf16.msra.mxu0 0
    %578 = vmatprep.subr.bf16.mxu0 0
    %579 = vmatpush2.bf16.msra.mxu0 0
    %580 = vmatprep.subr.bf16.mxu0 0
    %581 = vmatpush2.bf16.msra.mxu0 0
    %582 = vmatprep.subr.bf16.mxu0 0
    %583 = vmatpush2.bf16.msra.mxu0 0
    %584 = vmatprep.subr.bf16.mxu0 0
    %585 = vmatpush2.bf16.msra.mxu0 0
    %586 = vmatprep.mubr.bf16.mxu0 0
    %587 = vmatmul.mubr.bf16.gmra.mxu0 %v440
    %v588 = vpop.f32.mrf.mxu0
    %v589 = vadd.f32 0.0, %v588
    %v590 = vpop.f32.mrf.mxu0
    %v591 = vpop.f32.mrf.mxu0
    %v592 = vpop.f32.mrf.mxu0
    %593 = vdwg.mxu0
    %v595 = vrot.slane %v589, 6
    %v597 = vadd.f32 %v140, %v595
    %v598 = vxor.u32 %v597, 2147483648
    %v599 = vmul.f32 %v598, 1.442695
    %v600 = vpow.pop %v599
    %v601 = vadd.f32 %v600, 1.0
    %v602 = vrcp.pop %v601
    %v603 = vmul.f32 1.0, %v602
    %v604 = vtanh.pop %v597
    %v606 = vrot.slane %v426, 7
    %v608 = vmul.f32 %v603, %v606
    %610 = vrot.lane.b32.xlu0 %v604, 64
    %v611 = vpop.permute.xlu0 %610
    %v613 = vmul.f32 %v603, %v611
    %615 = vrot.lane.b32.xlu0 %v613, 32
    %v616 = vpop.permute.xlu0 %615
    %v618 = vadd.f32 %v608, %v616
    %v619 = vtanh.pop %v618
    %621 = vrot.lane.b32.xlu0 %v619, 64
    %v622 = vpop.permute.xlu0 %621
    %v624 = vmul.f32 %v603, %v622
    %v625 = vpack.c.bf16 %v624, %v624
    %v627 = vrot.slane %v625, 1
    %628 = vrot.lane.b32.xlu0 %v627, 32
    %v629 = vpop.permute.xlu0 %628
    %v631 = vsel %vm157, %v629, 0
    %633 = vmatprep.subr.bf16.mxu0 0
    %634 = vmatpush1.bf16.msra.mxu0 0
    %635 = vmatprep.subr.bf16.mxu0 0
    %636 = vmatpush1.bf16.msra.mxu0 0
    %637 = vmatprep.subr.bf16.mxu0 0
    %638 = vmatpush1.bf16.msra.mxu0 0
    %639 = vmatprep.subr.bf16.mxu0 0
    %640 = vmatpush1.bf16.msra.mxu0 0
    %641 = vmatprep.subr.bf16.mxu0 0
    %642 = vmatpush1.bf16.msra.mxu0 0
    %643 = vmatprep.subr.bf16.mxu0 0
    %644 = vmatpush1.bf16.msra.mxu0 0
    %645 = vmatprep.subr.bf16.mxu0 0
    %646 = vmatpush1.bf16.msra.mxu0 %v239
    %647 = vmatprep.subr.bf16.mxu0 0
    %648 = vmatpush1.bf16.msra.mxu0 %v238
    %649 = vmatprep.subr.bf16.mxu0 0
    %650 = vmatpush2.bf16.msra.mxu0 0
    %651 = vmatprep.subr.bf16.mxu0 0
    %652 = vmatpush2.bf16.msra.mxu0 0
    %653 = vmatprep.subr.bf16.mxu0 0
    %654 = vmatpush2.bf16.msra.mxu0 0
    %655 = vmatprep.subr.bf16.mxu0 0
    %656 = vmatpush2.bf16.msra.mxu0 0
    %657 = vmatprep.subr.bf16.mxu0 0
    %658 = vmatpush2.bf16.msra.mxu0 0
    %659 = vmatprep.subr.bf16.mxu0 0
    %660 = vmatpush2.bf16.msra.mxu0 0
    %661 = vmatprep.subr.bf16.mxu0 0
    %662 = vmatpush2.bf16.msra.mxu0 0
    %663 = vmatprep.subr.bf16.mxu0 0
    %664 = vmatpush2.bf16.msra.mxu0 0
    %665 = vmatprep.mubr.bf16.mxu0 0
    %666 = vmatmul.mubr.bf16.gmra.mxu0 %v631
    %v667 = vpop.f32.mrf.mxu0
    %v668 = vadd.f32 %v89, %v667
    %v669 = vpop.f32.mrf.mxu0
    %v670 = vpop.f32.mrf.mxu0
    %v671 = vpop.f32.mrf.mxu0
    %672 = vdwg.mxu0
    %v673 = vpack.c.bf16 %v553, %v553
    %675 = vrot.lane.b32.xlu0 %v673, 32
    %v676 = vpop.permute.xlu0 %675
    %v678 = vsel %vm157, %v676, 0
    %680 = vmatprep.subr.bf16.mxu0 0
    %681 = vmatpush1.bf16.msra.mxu0 0
    %682 = vmatprep.subr.bf16.mxu0 0
    %683 = vmatpush1.bf16.msra.mxu0 0
    %684 = vmatprep.subr.bf16.mxu0 0
    %685 = vmatpush1.bf16.msra.mxu0 0
    %686 = vmatprep.subr.bf16.mxu0 0
    %687 = vmatpush1.bf16.msra.mxu0 0
    %688 = vmatprep.subr.bf16.mxu0 0
    %689 = vmatpush1.bf16.msra.mxu0 0
    %690 = vmatprep.subr.bf16.mxu0 0
    %691 = vmatpush1.bf16.msra.mxu0 0
    %692 = vmatprep.subr.bf16.mxu0 0
    %693 = vmatpush1.bf16.msra.mxu0 %v294
    %694 = vmatprep.subr.bf16.mxu0 0
    %695 = vmatpush1.bf16.msra.mxu0 %v293
    %696 = vmatprep.subr.bf16.mxu0 0
    %697 = vmatpush2.bf16.msra.mxu0 0
    %698 = vmatprep.subr.bf16.mxu0 0
    %699 = vmatpush2.bf16.msra.mxu0 0
    %700 = vmatprep.subr.bf16.mxu0 0
    %701 = vmatpush2.bf16.msra.mxu0 0
    %702 = vmatprep.subr.bf16.mxu0 0
    %703 = vmatpush2.bf16.msra.mxu0 0
    %704 = vmatprep.subr.bf16.mxu0 0
    %705 = vmatpush2.bf16.msra.mxu0 0
    %706 = vmatprep.subr.bf16.mxu0 0
    %707 = vmatpush2.bf16.msra.mxu0 0
    %708 = vmatprep.subr.bf16.mxu0 0
    %709 = vmatpush2.bf16.msra.mxu0 0
    %710 = vmatprep.subr.bf16.mxu0 0
    %711 = vmatpush2.bf16.msra.mxu0 0
    %712 = vmatprep.mubr.bf16.mxu0 0
    %713 = vmatmul.mubr.bf16.gmra.mxu0 %v678
    %v714 = vpop.f32.mrf.mxu0
    %v715 = vadd.f32 0.0, %v714
    %v716 = vpop.f32.mrf.mxu0
    %v717 = vpop.f32.mrf.mxu0
    %v718 = vpop.f32.mrf.mxu0
    %719 = vdwg.mxu0
    %v720 = vadd.f32 %v668, %v715
    %v721 = vxor.u32 %v720, 2147483648
    %v722 = vmul.f32 %v721, 1.442695
    %v723 = vpow.pop %v722
    %v724 = vadd.f32 %v723, 1.0
    %v725 = vrcp.pop %v724
    %v726 = vmul.f32 1.0, %v725
    %v727 = vtanh.pop %v720
    %v728 = vmul.f32 %v726, %v547
    %730 = vrot.lane.b32.xlu0 %v727, 64
    %v731 = vpop.permute.xlu0 %730
    %v733 = vmul.f32 %v726, %v731
    %735 = vrot.lane.b32.xlu0 %v733, 32
    %v736 = vpop.permute.xlu0 %735
    %v738 = vadd.f32 %v728, %v736
    %v739 = vtanh.pop %v738
    %741 = vrot.lane.b32.xlu0 %v739, 64
    %v742 = vpop.permute.xlu0 %741
    %v744 = vmul.f32 %v726, %v742
    %745 = vmatprep.subr.bf16.mxu0 0
    %746 = vmatpush1.bf16.msra.mxu0 0
    %747 = vmatprep.subr.bf16.mxu0 0
    %748 = vmatpush1.bf16.msra.mxu0 0
    %749 = vmatprep.subr.bf16.mxu0 0
    %750 = vmatpush1.bf16.msra.mxu0 0
    %751 = vmatprep.subr.bf16.mxu0 0
    %752 = vmatpush1.bf16.msra.mxu0 0
    %753 = vmatprep.subr.bf16.mxu0 0
    %754 = vmatpush1.bf16.msra.mxu0 0
    %755 = vmatprep.subr.bf16.mxu0 0
    %756 = vmatpush1.bf16.msra.mxu0 0
    %757 = vmatprep.subr.bf16.mxu0 0
    %758 = vmatpush1.bf16.msra.mxu0 %v154
    %759 = vmatprep.subr.bf16.mxu0 0
    %760 = vmatpush1.bf16.msra.mxu0 %v153
    %761 = vmatprep.subr.bf16.mxu0 0
    %762 = vmatpush2.bf16.msra.mxu0 0
    %763 = vmatprep.subr.bf16.mxu0 0
    %764 = vmatpush2.bf16.msra.mxu0 0
    %765 = vmatprep.subr.bf16.mxu0 0
    %766 = vmatpush2.bf16.msra.mxu0 0
    %767 = vmatprep.subr.bf16.mxu0 0
    %768 = vmatpush2.bf16.msra.mxu0 0
    %769 = vmatprep.subr.bf16.mxu0 0
    %770 = vmatpush2.bf16.msra.mxu0 0
    %771 = vmatprep.subr.bf16.mxu0 0
    %772 = vmatpush2.bf16.msra.mxu0 0
    %773 = vmatprep.subr.bf16.mxu0 0
    %774 = vmatpush2.bf16.msra.mxu0 0
    %775 = vmatprep.subr.bf16.mxu0 0
    %776 = vmatpush2.bf16.msra.mxu0 0
    %777 = vmatprep.mubr.bf16.mxu0 0
    %778 = vmatmul.mubr.bf16.gmra.mxu0 %v631
    %v779 = vpop.f32.mrf.mxu0
    %v780 = vadd.f32 0.0, %v779
    %v781 = vpop.f32.mrf.mxu0
    %v782 = vpop.f32.mrf.mxu0
    %v783 = vpop.f32.mrf.mxu0
    %784 = vdwg.mxu0
    %v786 = vrot.slane %v780, 5
    %v788 = vadd.f32 %v140, %v786
    %v789 = vxor.u32 %v788, 2147483648
    %v790 = vmul.f32 %v789, 1.442695
    %v791 = vpow.pop %v790
    %v792 = vadd.f32 %v791, 1.0
    %v793 = vrcp.pop %v792
    %v794 = vmul.f32 1.0, %v793
    %v795 = vtanh.pop %v788
    %v797 = vrot.slane %v618, 7
    %v799 = vmul.f32 %v794, %v797
    %801 = vrot.lane.b32.xlu0 %v795, 64
    %v802 = vpop.permute.xlu0 %801
    %v804 = vmul.f32 %v794, %v802
    %806 = vrot.lane.b32.xlu0 %v804, 32
    %v807 = vpop.permute.xlu0 %806
    %v809 = vadd.f32 %v799, %v807
    %v810 = vtanh.pop %v809
    %812 = vrot.lane.b32.xlu0 %v810, 64
    %v813 = vpop.permute.xlu0 %812
    %v815 = vmul.f32 %v794, %v813
    %v816 = vpack.c.bf16 %v815, %v815
    %v818 = vshrl.u32 %v816, 16
    %v820 = vrot.slane %v818, 1
    %821 = vrot.lane.b32.xlu0 %v820, 32
    %v822 = vpop.permute.xlu0 %821
    %v824 = vsel %vm157, %v822, 0
    %826 = vmatprep.subr.bf16.mxu0 0
    %827 = vmatpush1.bf16.msra.mxu0 0
    %828 = vmatprep.subr.bf16.mxu0 0
    %829 = vmatpush1.bf16.msra.mxu0 0
    %830 = vmatprep.subr.bf16.mxu0 0
    %831 = vmatpush1.bf16.msra.mxu0 0
    %832 = vmatprep.subr.bf16.mxu0 0
    %833 = vmatpush1.bf16.msra.mxu0 0
    %834 = vmatprep.subr.bf16.mxu0 0
    %835 = vmatpush1.bf16.msra.mxu0 0
    %836 = vmatprep.subr.bf16.mxu0 0
    %837 = vmatpush1.bf16.msra.mxu0 0
    %838 = vmatprep.subr.bf16.mxu0 0
    %839 = vmatpush1.bf16.msra.mxu0 %v239
    %840 = vmatprep.subr.bf16.mxu0 0
    %841 = vmatpush1.bf16.msra.mxu0 %v238
    %842 = vmatprep.subr.bf16.mxu0 0
    %843 = vmatpush2.bf16.msra.mxu0 0
    %844 = vmatprep.subr.bf16.mxu0 0
    %845 = vmatpush2.bf16.msra.mxu0 0
    %846 = vmatprep.subr.bf16.mxu0 0
    %847 = vmatpush2.bf16.msra.mxu0 0
    %848 = vmatprep.subr.bf16.mxu0 0
    %849 = vmatpush2.bf16.msra.mxu0 0
    %850 = vmatprep.subr.bf16.mxu0 0
    %851 = vmatpush2.bf16.msra.mxu0 0
    %852 = vmatprep.subr.bf16.mxu0 0
    %853 = vmatpush2.bf16.msra.mxu0 0
    %854 = vmatprep.subr.bf16.mxu0 0
    %855 = vmatpush2.bf16.msra.mxu0 0
    %856 = vmatprep.subr.bf16.mxu0 0
    %857 = vmatpush2.bf16.msra.mxu0 0
    %858 = vmatprep.mubr.bf16.mxu0 0
    %859 = vmatmul.mubr.bf16.gmra.mxu0 %v824
    %v860 = vpop.f32.mrf.mxu0
    %v861 = vadd.f32 %v89, %v860
    %v862 = vpop.f32.mrf.mxu0
    %v863 = vpop.f32.mrf.mxu0
    %v864 = vpop.f32.mrf.mxu0
    %865 = vdwg.mxu0
    %v866 = vpack.c.bf16 %v744, %v744
    %868 = vrot.lane.b32.xlu0 %v866, 32
    %v869 = vpop.permute.xlu0 %868
    %v871 = vsel %vm157, %v869, 0
    %873 = vmatprep.subr.bf16.mxu0 0
    %874 = vmatpush1.bf16.msra.mxu0 0
    %875 = vmatprep.subr.bf16.mxu0 0
    %876 = vmatpush1.bf16.msra.mxu0 0
    %877 = vmatprep.subr.bf16.mxu0 0
    %878 = vmatpush1.bf16.msra.mxu0 0
    %879 = vmatprep.subr.bf16.mxu0 0
    %880 = vmatpush1.bf16.msra.mxu0 0
    %881 = vmatprep.subr.bf16.mxu0 0
    %882 = vmatpush1.bf16.msra.mxu0 0
    %883 = vmatprep.subr.bf16.mxu0 0
    %884 = vmatpush1.bf16.msra.mxu0 0
    %885 = vmatprep.subr.bf16.mxu0 0
    %886 = vmatpush1.bf16.msra.mxu0 %v294
    %887 = vmatprep.subr.bf16.mxu0 0
    %888 = vmatpush1.bf16.msra.mxu0 %v293
    %889 = vmatprep.subr.bf16.mxu0 0
    %890 = vmatpush2.bf16.msra.mxu0 0
    %891 = vmatprep.subr.bf16.mxu0 0
    %892 = vmatpush2.bf16.msra.mxu0 0
    %893 = vmatprep.subr.bf16.mxu0 0
    %894 = vmatpush2.bf16.msra.mxu0 0
    %895 = vmatprep.subr.bf16.mxu0 0
    %896 = vmatpush2.bf16.msra.mxu0 0
    %897 = vmatprep.subr.bf16.mxu0 0
    %898 = vmatpush2.bf16.msra.mxu0 0
    %899 = vmatprep.subr.bf16.mxu0 0
    %900 = vmatpush2.bf16.msra.mxu0 0
    %901 = vmatprep.subr.bf16.mxu0 0
    %902 = vmatpush2.bf16.msra.mxu0 0
    %903 = vmatprep.subr.bf16.mxu0 0
    %904 = vmatpush2.bf16.msra.mxu0 0
    %905 = vmatprep.mubr.bf16.mxu0 0
    %906 = vmatmul.mubr.bf16.gmra.mxu0 %v871
    %v907 = vpop.f32.mrf.mxu0
    %v908 = vadd.f32 0.0, %v907
    %v909 = vpop.f32.mrf.mxu0
    %v910 = vpop.f32.mrf.mxu0
    %v911 = vpop.f32.mrf.mxu0
    %912 = vdwg.mxu0
    %v913 = vadd.f32 %v861, %v908
    %v914 = vxor.u32 %v913, 2147483648
    %v915 = vmul.f32 %v914, 1.442695
    %v916 = vpow.pop %v915
    %v917 = vadd.f32 %v916, 1.0
    %v918 = vrcp.pop %v917
    %v919 = vmul.f32 1.0, %v918
    %v920 = vtanh.pop %v913
    %v921 = vmul.f32 %v919, %v738
    %923 = vrot.lane.b32.xlu0 %v920, 64
    %v924 = vpop.permute.xlu0 %923
    %v926 = vmul.f32 %v919, %v924
    %928 = vrot.lane.b32.xlu0 %v926, 32
    %v929 = vpop.permute.xlu0 %928
    %v931 = vadd.f32 %v921, %v929
    %v932 = vtanh.pop %v931
    %934 = vrot.lane.b32.xlu0 %v932, 64
    %v935 = vpop.permute.xlu0 %934
    %v937 = vmul.f32 %v919, %v935
    %938 = vmatprep.subr.bf16.mxu0 0
    %939 = vmatpush1.bf16.msra.mxu0 0
    %940 = vmatprep.subr.bf16.mxu0 0
    %941 = vmatpush1.bf16.msra.mxu0 0
    %942 = vmatprep.subr.bf16.mxu0 0
    %943 = vmatpush1.bf16.msra.mxu0 0
    %944 = vmatprep.subr.bf16.mxu0 0
    %945 = vmatpush1.bf16.msra.mxu0 0
    %946 = vmatprep.subr.bf16.mxu0 0
    %947 = vmatpush1.bf16.msra.mxu0 0
    %948 = vmatprep.subr.bf16.mxu0 0
    %949 = vmatpush1.bf16.msra.mxu0 0
    %950 = vmatprep.subr.bf16.mxu0 0
    %951 = vmatpush1.bf16.msra.mxu0 %v154
    %952 = vmatprep.subr.bf16.mxu0 0
    %953 = vmatpush1.bf16.msra.mxu0 %v153
    %954 = vmatprep.subr.bf16.mxu0 0
    %955 = vmatpush2.bf16.msra.mxu0 0
    %956 = vmatprep.subr.bf16.mxu0 0
    %957 = vmatpush2.bf16.msra.mxu0 0
    %958 = vmatprep.subr.bf16.mxu0 0
    %959 = vmatpush2.bf16.msra.mxu0 0
    %960 = vmatprep.subr.bf16.mxu0 0
    %961 = vmatpush2.bf16.msra.mxu0 0
    %962 = vmatprep.subr.bf16.mxu0 0
    %963 = vmatpush2.bf16.msra.mxu0 0
    %964 = vmatprep.subr.bf16.mxu0 0
    %965 = vmatpush2.bf16.msra.mxu0 0
    %966 = vmatprep.subr.bf16.mxu0 0
    %967 = vmatpush2.bf16.msra.mxu0 0
    %968 = vmatprep.subr.bf16.mxu0 0
    %969 = vmatpush2.bf16.msra.mxu0 0
    %970 = vmatprep.mubr.bf16.mxu0 0
    %971 = vmatmul.mubr.bf16.gmra.mxu0 %v824
    %v972 = vpop.f32.mrf.mxu0
    %v973 = vadd.f32 0.0, %v972
    %v974 = vpop.f32.mrf.mxu0
    %v975 = vpop.f32.mrf.mxu0
    %v976 = vpop.f32.mrf.mxu0
    %977 = vdwg.mxu0
    %v979 = vrot.slane %v973, 4
    %v981 = vadd.f32 %v140, %v979
    %v982 = vxor.u32 %v981, 2147483648
    %v983 = vmul.f32 %v982, 1.442695
    %v984 = vpow.pop %v983
    %v985 = vadd.f32 %v984, 1.0
    %v986 = vrcp.pop %v985
    %v987 = vmul.f32 1.0, %v986
    %v988 = vtanh.pop %v981
    %v990 = vrot.slane %v809, 7
    %v992 = vmul.f32 %v987, %v990
    %994 = vrot.lane.b32.xlu0 %v988, 64
    %v995 = vpop.permute.xlu0 %994
    %v997 = vmul.f32 %v987, %v995
    %999 = vrot.lane.b32.xlu0 %v997, 32
    %v1000 = vpop.permute.xlu0 %999
    %v1002 = vadd.f32 %v992, %v1000
    %v1003 = vtanh.pop %v1002
    %1005 = vrot.lane.b32.xlu0 %v1003, 64
    %v1006 = vpop.permute.xlu0 %1005
    %v1008 = vmul.f32 %v987, %v1006
    %v1009 = vpack.c.bf16 %v1008, %v1008
    %v1011 = vrot.slane %v1009, 2
    %1012 = vrot.lane.b32.xlu0 %v1011, 32
    %v1013 = vpop.permute.xlu0 %1012
    %v1015 = vsel %vm157, %v1013, 0
    %1017 = vmatprep.subr.bf16.mxu0 0
    %1018 = vmatpush1.bf16.msra.mxu0 0
    %1019 = vmatprep.subr.bf16.mxu0 0
    %1020 = vmatpush1.bf16.msra.mxu0 0
    %1021 = vmatprep.subr.bf16.mxu0 0
    %1022 = vmatpush1.bf16.msra.mxu0 0
    %1023 = vmatprep.subr.bf16.mxu0 0
    %1024 = vmatpush1.bf16.msra.mxu0 0
    %1025 = vmatprep.subr.bf16.mxu0 0
    %1026 = vmatpush1.bf16.msra.mxu0 0
    %1027 = vmatprep.subr.bf16.mxu0 0
    %1028 = vmatpush1.bf16.msra.mxu0 0
    %1029 = vmatprep.subr.bf16.mxu0 0
    %1030 = vmatpush1.bf16.msra.mxu0 %v239
    %1031 = vmatprep.subr.bf16.mxu0 0
    %1032 = vmatpush1.bf16.msra.mxu0 %v238
    %1033 = vmatprep.subr.bf16.mxu0 0
    %1034 = vmatpush2.bf16.msra.mxu0 0
    %1035 = vmatprep.subr.bf16.mxu0 0
    %1036 = vmatpush2.bf16.msra.mxu0 0
    %1037 = vmatprep.subr.bf16.mxu0 0
    %1038 = vmatpush2.bf16.msra.mxu0 0
    %1039 = vmatprep.subr.bf16.mxu0 0
    %1040 = vmatpush2.bf16.msra.mxu0 0
    %1041 = vmatprep.subr.bf16.mxu0 0
    %1042 = vmatpush2.bf16.msra.mxu0 0
    %1043 = vmatprep.subr.bf16.mxu0 0
    %1044 = vmatpush2.bf16.msra.mxu0 0
    %1045 = vmatprep.subr.bf16.mxu0 0
    %1046 = vmatpush2.bf16.msra.mxu0 0
    %1047 = vmatprep.subr.bf16.mxu0 0
    %1048 = vmatpush2.bf16.msra.mxu0 0
    %1049 = vmatprep.mubr.bf16.mxu0 0
    %1050 = vmatmul.mubr.bf16.gmra.mxu0 %v1015
    %v1051 = vpop.f32.mrf.mxu0
    %v1052 = vadd.f32 %v89, %v1051
    %v1053 = vpop.f32.mrf.mxu0
    %v1054 = vpop.f32.mrf.mxu0
    %v1055 = vpop.f32.mrf.mxu0
    %1056 = vdwg.mxu0
    %v1057 = vpack.c.bf16 %v937, %v937
    %1059 = vrot.lane.b32.xlu0 %v1057, 32
    %v1060 = vpop.permute.xlu0 %1059
    %v1062 = vsel %vm157, %v1060, 0
    %1064 = vmatprep.subr.bf16.mxu0 0
    %1065 = vmatpush1.bf16.msra.mxu0 0
    %1066 = vmatprep.subr.bf16.mxu0 0
    %1067 = vmatpush1.bf16.msra.mxu0 0
    %1068 = vmatprep.subr.bf16.mxu0 0
    %1069 = vmatpush1.bf16.msra.mxu0 0
    %1070 = vmatprep.subr.bf16.mxu0 0
    %1071 = vmatpush1.bf16.msra.mxu0 0
    %1072 = vmatprep.subr.bf16.mxu0 0
    %1073 = vmatpush1.bf16.msra.mxu0 0
    %1074 = vmatprep.subr.bf16.mxu0 0
    %1075 = vmatpush1.bf16.msra.mxu0 0
    %1076 = vmatprep.subr.bf16.mxu0 0
    %1077 = vmatpush1.bf16.msra.mxu0 %v294
    %1078 = vmatprep.subr.bf16.mxu0 0
    %1079 = vmatpush1.bf16.msra.mxu0 %v293
    %1080 = vmatprep.subr.bf16.mxu0 0
    %1081 = vmatpush2.bf16.msra.mxu0 0
    %1082 = vmatprep.subr.bf16.mxu0 0
    %1083 = vmatpush2.bf16.msra.mxu0 0
    %1084 = vmatprep.subr.bf16.mxu0 0
    %1085 = vmatpush2.bf16.msra.mxu0 0
    %1086 = vmatprep.subr.bf16.mxu0 0
    %1087 = vmatpush2.bf16.msra.mxu0 0
    %1088 = vmatprep.subr.bf16.mxu0 0
    %1089 = vmatpush2.bf16.msra.mxu0 0
    %1090 = vmatprep.subr.bf16.mxu0 0
    %1091 = vmatpush2.bf16.msra.mxu0 0
    %1092 = vmatprep.subr.bf16.mxu0 0
    %1093 = vmatpush2.bf16.msra.mxu0 0
    %1094 = vmatprep.subr.bf16.mxu0 0
    %1095 = vmatpush2.bf16.msra.mxu0 0
    %1096 = vmatprep.mubr.bf16.mxu0 0
    %1097 = vmatmul.mubr.bf16.gmra.mxu0 %v1062
    %v1098 = vpop.f32.mrf.mxu0
    %v1099 = vadd.f32 0.0, %v1098
    %v1100 = vpop.f32.mrf.mxu0
    %v1101 = vpop.f32.mrf.mxu0
    %v1102 = vpop.f32.mrf.mxu0
    %1103 = vdwg.mxu0
    %v1104 = vadd.f32 %v1052, %v1099
    %v1105 = vxor.u32 %v1104, 2147483648
    %v1106 = vmul.f32 %v1105, 1.442695
    %v1107 = vpow.pop %v1106
    %v1108 = vadd.f32 %v1107, 1.0
    %v1109 = vrcp.pop %v1108
    %v1110 = vmul.f32 1.0, %v1109
    %v1111 = vtanh.pop %v1104
    %v1112 = vmul.f32 %v1110, %v931
    %1114 = vrot.lane.b32.xlu0 %v1111, 64
    %v1115 = vpop.permute.xlu0 %1114
    %v1117 = vmul.f32 %v1110, %v1115
    %1119 = vrot.lane.b32.xlu0 %v1117, 32
    %v1120 = vpop.permute.xlu0 %1119
    %v1122 = vadd.f32 %v1112, %v1120
    %v1123 = vtanh.pop %v1122
    %1125 = vrot.lane.b32.xlu0 %v1123, 64
    %v1126 = vpop.permute.xlu0 %1125
    %v1128 = vmul.f32 %v1110, %v1126
    %1129 = vmatprep.subr.bf16.mxu0 0
    %1130 = vmatpush1.bf16.msra.mxu0 0
    %1131 = vmatprep.subr.bf16.mxu0 0
    %1132 = vmatpush1.bf16.msra.mxu0 0
    %1133 = vmatprep.subr.bf16.mxu0 0
    %1134 = vmatpush1.bf16.msra.mxu0 0
    %1135 = vmatprep.subr.bf16.mxu0 0
    %1136 = vmatpush1.bf16.msra.mxu0 0
    %1137 = vmatprep.subr.bf16.mxu0 0
    %1138 = vmatpush1.bf16.msra.mxu0 0
    %1139 = vmatprep.subr.bf16.mxu0 0
    %1140 = vmatpush1.bf16.msra.mxu0 0
    %1141 = vmatprep.subr.bf16.mxu0 0
    %1142 = vmatpush1.bf16.msra.mxu0 %v154
    %1143 = vmatprep.subr.bf16.mxu0 0
    %1144 = vmatpush1.bf16.msra.mxu0 %v153
    %1145 = vmatprep.subr.bf16.mxu0 0
    %1146 = vmatpush2.bf16.msra.mxu0 0
    %1147 = vmatprep.subr.bf16.mxu0 0
    %1148 = vmatpush2.bf16.msra.mxu0 0
    %1149 = vmatprep.subr.bf16.mxu0 0
    %1150 = vmatpush2.bf16.msra.mxu0 0
    %1151 = vmatprep.subr.bf16.mxu0 0
    %1152 = vmatpush2.bf16.msra.mxu0 0
    %1153 = vmatprep.subr.bf16.mxu0 0
    %1154 = vmatpush2.bf16.msra.mxu0 0
    %1155 = vmatprep.subr.bf16.mxu0 0
    %1156 = vmatpush2.bf16.msra.mxu0 0
    %1157 = vmatprep.subr.bf16.mxu0 0
    %1158 = vmatpush2.bf16.msra.mxu0 0
    %1159 = vmatprep.subr.bf16.mxu0 0
    %1160 = vmatpush2.bf16.msra.mxu0 0
    %1161 = vmatprep.mubr.bf16.mxu0 0
    %1162 = vmatmul.mubr.bf16.gmra.mxu0 %v1015
    %v1163 = vpop.f32.mrf.mxu0
    %v1164 = vadd.f32 0.0, %v1163
    %v1165 = vpop.f32.mrf.mxu0
    %v1166 = vpop.f32.mrf.mxu0
    %v1167 = vpop.f32.mrf.mxu0
    %1168 = vdwg.mxu0
    %v1170 = vrot.slane %v1164, 3
    %v1172 = vadd.f32 %v140, %v1170
    %v1173 = vxor.u32 %v1172, 2147483648
    %v1174 = vmul.f32 %v1173, 1.442695
    %v1175 = vpow.pop %v1174
    %v1176 = vadd.f32 %v1175, 1.0
    %v1177 = vrcp.pop %v1176
    %v1178 = vmul.f32 1.0, %v1177
    %v1179 = vtanh.pop %v1172
    %v1181 = vrot.slane %v1002, 7
    %v1183 = vmul.f32 %v1178, %v1181
    %1185 = vrot.lane.b32.xlu0 %v1179, 64
    %v1186 = vpop.permute.xlu0 %1185
    %v1188 = vmul.f32 %v1178, %v1186
    %1190 = vrot.lane.b32.xlu0 %v1188, 32
    %v1191 = vpop.permute.xlu0 %1190
    %v1193 = vadd.f32 %v1183, %v1191
    %v1194 = vtanh.pop %v1193
    %1196 = vrot.lane.b32.xlu0 %v1194, 64
    %v1197 = vpop.permute.xlu0 %1196
    %v1199 = vmul.f32 %v1178, %v1197
    %v1200 = vpack.c.bf16 %v1199, %v1199
    %v1202 = vshrl.u32 %v1200, 16
    %v1204 = vrot.slane %v1202, 2
    %1205 = vrot.lane.b32.xlu0 %v1204, 32
    %v1206 = vpop.permute.xlu0 %1205
    %v1208 = vsel %vm157, %v1206, 0
    %1210 = vmatprep.subr.bf16.mxu0 0
    %1211 = vmatpush1.bf16.msra.mxu0 0
    %1212 = vmatprep.subr.bf16.mxu0 0
    %1213 = vmatpush1.bf16.msra.mxu0 0
    %1214 = vmatprep.subr.bf16.mxu0 0
    %1215 = vmatpush1.bf16.msra.mxu0 0
    %1216 = vmatprep.subr.bf16.mxu0 0
    %1217 = vmatpush1.bf16.msra.mxu0 0
    %1218 = vmatprep.subr.bf16.mxu0 0
    %1219 = vmatpush1.bf16.msra.mxu0 0
    %1220 = vmatprep.subr.bf16.mxu0 0
    %1221 = vmatpush1.bf16.msra.mxu0 0
    %1222 = vmatprep.subr.bf16.mxu0 0
    %1223 = vmatpush1.bf16.msra.mxu0 %v239
    %1224 = vmatprep.subr.bf16.mxu0 0
    %1225 = vmatpush1.bf16.msra.mxu0 %v238
    %1226 = vmatprep.subr.bf16.mxu0 0
    %1227 = vmatpush2.bf16.msra.mxu0 0
    %1228 = vmatprep.subr.bf16.mxu0 0
    %1229 = vmatpush2.bf16.msra.mxu0 0
    %1230 = vmatprep.subr.bf16.mxu0 0
    %1231 = vmatpush2.bf16.msra.mxu0 0
    %1232 = vmatprep.subr.bf16.mxu0 0
    %1233 = vmatpush2.bf16.msra.mxu0 0
    %1234 = vmatprep.subr.bf16.mxu0 0
    %1235 = vmatpush2.bf16.msra.mxu0 0
    %1236 = vmatprep.subr.bf16.mxu0 0
    %1237 = vmatpush2.bf16.msra.mxu0 0
    %1238 = vmatprep.subr.bf16.mxu0 0
    %1239 = vmatpush2.bf16.msra.mxu0 0
    %1240 = vmatprep.subr.bf16.mxu0 0
    %1241 = vmatpush2.bf16.msra.mxu0 0
    %1242 = vmatprep.mubr.bf16.mxu0 0
    %1243 = vmatmul.mubr.bf16.gmra.mxu0 %v1208
    %v1244 = vpop.f32.mrf.mxu0
    %v1245 = vadd.f32 %v89, %v1244
    %v1246 = vpop.f32.mrf.mxu0
    %v1247 = vpop.f32.mrf.mxu0
    %v1248 = vpop.f32.mrf.mxu0
    %1249 = vdwg.mxu0
    %v1250 = vpack.c.bf16 %v1128, %v1128
    %1252 = vrot.lane.b32.xlu0 %v1250, 32
    %v1253 = vpop.permute.xlu0 %1252
    %v1255 = vsel %vm157, %v1253, 0
    %1257 = vmatprep.subr.bf16.mxu0 0
    %1258 = vmatpush1.bf16.msra.mxu0 0
    %1259 = vmatprep.subr.bf16.mxu0 0
    %1260 = vmatpush1.bf16.msra.mxu0 0
    %1261 = vmatprep.subr.bf16.mxu0 0
    %1262 = vmatpush1.bf16.msra.mxu0 0
    %1263 = vmatprep.subr.bf16.mxu0 0
    %1264 = vmatpush1.bf16.msra.mxu0 0
    %1265 = vmatprep.subr.bf16.mxu0 0
    %1266 = vmatpush1.bf16.msra.mxu0 0
    %1267 = vmatprep.subr.bf16.mxu0 0
    %1268 = vmatpush1.bf16.msra.mxu0 0
    %1269 = vmatprep.subr.bf16.mxu0 0
    %1270 = vmatpush1.bf16.msra.mxu0 %v294
    %1271 = vmatprep.subr.bf16.mxu0 0
    %1272 = vmatpush1.bf16.msra.mxu0 %v293
    %1273 = vmatprep.subr.bf16.mxu0 0
    %1274 = vmatpush2.bf16.msra.mxu0 0
    %1275 = vmatprep.subr.bf16.mxu0 0
    %1276 = vmatpush2.bf16.msra.mxu0 0
    %1277 = vmatprep.subr.bf16.mxu0 0
    %1278 = vmatpush2.bf16.msra.mxu0 0
    %1279 = vmatprep.subr.bf16.mxu0 0
    %1280 = vmatpush2.bf16.msra.mxu0 0
    %1281 = vmatprep.subr.bf16.mxu0 0
    %1282 = vmatpush2.bf16.msra.mxu0 0
    %1283 = vmatprep.subr.bf16.mxu0 0
    %1284 = vmatpush2.bf16.msra.mxu0 0
    %1285 = vmatprep.subr.bf16.mxu0 0
    %1286 = vmatpush2.bf16.msra.mxu0 0
    %1287 = vmatprep.subr.bf16.mxu0 0
    %1288 = vmatpush2.bf16.msra.mxu0 0
    %1289 = vmatprep.mubr.bf16.mxu0 0
    %1290 = vmatmul.mubr.bf16.gmra.mxu0 %v1255
    %v1291 = vpop.f32.mrf.mxu0
    %v1292 = vadd.f32 0.0, %v1291
    %v1293 = vpop.f32.mrf.mxu0
    %v1294 = vpop.f32.mrf.mxu0
    %v1295 = vpop.f32.mrf.mxu0
    %1296 = vdwg.mxu0
    %v1297 = vadd.f32 %v1245, %v1292
    %v1298 = vxor.u32 %v1297, 2147483648
    %v1299 = vmul.f32 %v1298, 1.442695
    %v1300 = vpow.pop %v1299
    %v1301 = vadd.f32 %v1300, 1.0
    %v1302 = vrcp.pop %v1301
    %v1303 = vmul.f32 1.0, %v1302
    %v1304 = vtanh.pop %v1297
    %v1305 = vmul.f32 %v1303, %v1122
    %1307 = vrot.lane.b32.xlu0 %v1304, 64
    %v1308 = vpop.permute.xlu0 %1307
    %v1310 = vmul.f32 %v1303, %v1308
    %1312 = vrot.lane.b32.xlu0 %v1310, 32
    %v1313 = vpop.permute.xlu0 %1312
    %v1315 = vadd.f32 %v1305, %v1313
    %v1316 = vtanh.pop %v1315
    %1318 = vrot.lane.b32.xlu0 %v1316, 64
    %v1319 = vpop.permute.xlu0 %1318
    %v1321 = vmul.f32 %v1303, %v1319
    %1322 = vmatprep.subr.bf16.mxu0 0
    %1323 = vmatpush1.bf16.msra.mxu0 0
    %1324 = vmatprep.subr.bf16.mxu0 0
    %1325 = vmatpush1.bf16.msra.mxu0 0
    %1326 = vmatprep.subr.bf16.mxu0 0
    %1327 = vmatpush1.bf16.msra.mxu0 0
    %1328 = vmatprep.subr.bf16.mxu0 0
    %1329 = vmatpush1.bf16.msra.mxu0 0
    %1330 = vmatprep.subr.bf16.mxu0 0
    %1331 = vmatpush1.bf16.msra.mxu0 0
    %1332 = vmatprep.subr.bf16.mxu0 0
    %1333 = vmatpush1.bf16.msra.mxu0 0
    %1334 = vmatprep.subr.bf16.mxu0 0
    %1335 = vmatpush1.bf16.msra.mxu0 %v154
    %1336 = vmatprep.subr.bf16.mxu0 0
    %1337 = vmatpush1.bf16.msra.mxu0 %v153
    %1338 = vmatprep.subr.bf16.mxu0 0
    %1339 = vmatpush2.bf16.msra.mxu0 0
    %1340 = vmatprep.subr.bf16.mxu0 0
    %1341 = vmatpush2.bf16.msra.mxu0 0
    %1342 = vmatprep.subr.bf16.mxu0 0
    %1343 = vmatpush2.bf16.msra.mxu0 0
    %1344 = vmatprep.subr.bf16.mxu0 0
    %1345 = vmatpush2.bf16.msra.mxu0 0
    %1346 = vmatprep.subr.bf16.mxu0 0
    %1347 = vmatpush2.bf16.msra.mxu0 0
    %1348 = vmatprep.subr.bf16.mxu0 0
    %1349 = vmatpush2.bf16.msra.mxu0 0
    %1350 = vmatprep.subr.bf16.mxu0 0
    %1351 = vmatpush2.bf16.msra.mxu0 0
    %1352 = vmatprep.subr.bf16.mxu0 0
    %1353 = vmatpush2.bf16.msra.mxu0 0
    %1354 = vmatprep.mubr.bf16.mxu0 0
    %1355 = vmatmul.mubr.bf16.gmra.mxu0 %v1208
    %v1356 = vpop.f32.mrf.mxu0
    %v1357 = vadd.f32 0.0, %v1356
    %v1358 = vpop.f32.mrf.mxu0
    %v1359 = vpop.f32.mrf.mxu0
    %v1360 = vpop.f32.mrf.mxu0
    %1361 = vdwg.mxu0
    %v1363 = vrot.slane %v1357, 2
    %v1365 = vadd.f32 %v140, %v1363
    %v1366 = vxor.u32 %v1365, 2147483648
    %v1367 = vmul.f32 %v1366, 1.442695
    %v1368 = vpow.pop %v1367
    %v1369 = vadd.f32 %v1368, 1.0
    %v1370 = vrcp.pop %v1369
    %v1371 = vmul.f32 1.0, %v1370
    %v1372 = vtanh.pop %v1365
    %v1374 = vrot.slane %v1193, 7
    %v1376 = vmul.f32 %v1371, %v1374
    %1378 = vrot.lane.b32.xlu0 %v1372, 64
    %v1379 = vpop.permute.xlu0 %1378
    %v1381 = vmul.f32 %v1371, %v1379
    %1383 = vrot.lane.b32.xlu0 %v1381, 32
    %v1384 = vpop.permute.xlu0 %1383
    %v1386 = vadd.f32 %v1376, %v1384
    %v1387 = vtanh.pop %v1386
    %1389 = vrot.lane.b32.xlu0 %v1387, 64
    %v1390 = vpop.permute.xlu0 %1389
    %v1392 = vmul.f32 %v1371, %v1390
    %v1393 = vpack.c.bf16 %v1392, %v1392
    %v1395 = vrot.slane %v1393, 3
    %1396 = vrot.lane.b32.xlu0 %v1395, 32
    %v1397 = vpop.permute.xlu0 %1396
    %v1399 = vsel %vm157, %v1397, 0
    %1401 = vmatprep.subr.bf16.mxu0 0
    %1402 = vmatpush1.bf16.msra.mxu0 0
    %1403 = vmatprep.subr.bf16.mxu0 0
    %1404 = vmatpush1.bf16.msra.mxu0 0
    %1405 = vmatprep.subr.bf16.mxu0 0
    %1406 = vmatpush1.bf16.msra.mxu0 0
    %1407 = vmatprep.subr.bf16.mxu0 0
    %1408 = vmatpush1.bf16.msra.mxu0 0
    %1409 = vmatprep.subr.bf16.mxu0 0
    %1410 = vmatpush1.bf16.msra.mxu0 0
    %1411 = vmatprep.subr.bf16.mxu0 0
    %1412 = vmatpush1.bf16.msra.mxu0 0
    %1413 = vmatprep.subr.bf16.mxu0 0
    %1414 = vmatpush1.bf16.msra.mxu0 %v239
    %1415 = vmatprep.subr.bf16.mxu0 0
    %1416 = vmatpush1.bf16.msra.mxu0 %v238
    %1417 = vmatprep.subr.bf16.mxu0 0
    %1418 = vmatpush2.bf16.msra.mxu0 0
    %1419 = vmatprep.subr.bf16.mxu0 0
    %1420 = vmatpush2.bf16.msra.mxu0 0
    %1421 = vmatprep.subr.bf16.mxu0 0
    %1422 = vmatpush2.bf16.msra.mxu0 0
    %1423 = vmatprep.subr.bf16.mxu0 0
    %1424 = vmatpush2.bf16.msra.mxu0 0
    %1425 = vmatprep.subr.bf16.mxu0 0
    %1426 = vmatpush2.bf16.msra.mxu0 0
    %1427 = vmatprep.subr.bf16.mxu0 0
    %1428 = vmatpush2.bf16.msra.mxu0 0
    %1429 = vmatprep.subr.bf16.mxu0 0
    %1430 = vmatpush2.bf16.msra.mxu0 0
    %1431 = vmatprep.subr.bf16.mxu0 0
    %1432 = vmatpush2.bf16.msra.mxu0 0
    %1433 = vmatprep.mubr.bf16.mxu0 0
    %1434 = vmatmul.mubr.bf16.gmra.mxu0 %v1399
    %v1435 = vpop.f32.mrf.mxu0
    %v1436 = vadd.f32 %v89, %v1435
    %v1437 = vpop.f32.mrf.mxu0
    %v1438 = vpop.f32.mrf.mxu0
    %v1439 = vpop.f32.mrf.mxu0
    %1440 = vdwg.mxu0
    %v1441 = vpack.c.bf16 %v1321, %v1321
    %1443 = vrot.lane.b32.xlu0 %v1441, 32
    %v1444 = vpop.permute.xlu0 %1443
    %v1446 = vsel %vm157, %v1444, 0
    %1448 = vmatprep.subr.bf16.mxu0 0
    %1449 = vmatpush1.bf16.msra.mxu0 0
    %1450 = vmatprep.subr.bf16.mxu0 0
    %1451 = vmatpush1.bf16.msra.mxu0 0
    %1452 = vmatprep.subr.bf16.mxu0 0
    %1453 = vmatpush1.bf16.msra.mxu0 0
    %1454 = vmatprep.subr.bf16.mxu0 0
    %1455 = vmatpush1.bf16.msra.mxu0 0
    %1456 = vmatprep.subr.bf16.mxu0 0
    %1457 = vmatpush1.bf16.msra.mxu0 0
    %1458 = vmatprep.subr.bf16.mxu0 0
    %1459 = vmatpush1.bf16.msra.mxu0 0
    %1460 = vmatprep.subr.bf16.mxu0 0
    %1461 = vmatpush1.bf16.msra.mxu0 %v294
    %1462 = vmatprep.subr.bf16.mxu0 0
    %1463 = vmatpush1.bf16.msra.mxu0 %v293
    %1464 = vmatprep.subr.bf16.mxu0 0
    %1465 = vmatpush2.bf16.msra.mxu0 0
    %1466 = vmatprep.subr.bf16.mxu0 0
    %1467 = vmatpush2.bf16.msra.mxu0 0
    %1468 = vmatprep.subr.bf16.mxu0 0
    %1469 = vmatpush2.bf16.msra.mxu0 0
    %1470 = vmatprep.subr.bf16.mxu0 0
    %1471 = vmatpush2.bf16.msra.mxu0 0
    %1472 = vmatprep.subr.bf16.mxu0 0
    %1473 = vmatpush2.bf16.msra.mxu0 0
    %1474 = vmatprep.subr.bf16.mxu0 0
    %1475 = vmatpush2.bf16.msra.mxu0 0
    %1476 = vmatprep.subr.bf16.mxu0 0
    %1477 = vmatpush2.bf16.msra.mxu0 0
    %1478 = vmatprep.subr.bf16.mxu0 0
    %1479 = vmatpush2.bf16.msra.mxu0 0
    %1480 = vmatprep.mubr.bf16.mxu0 0
    %1481 = vmatmul.mubr.bf16.gmra.mxu0 %v1446
    %v1482 = vpop.f32.mrf.mxu0
    %v1483 = vadd.f32 0.0, %v1482
    %v1484 = vpop.f32.mrf.mxu0
    %v1485 = vpop.f32.mrf.mxu0
    %v1486 = vpop.f32.mrf.mxu0
    %1487 = vdwg.mxu0
    %v1488 = vadd.f32 %v1436, %v1483
    %v1489 = vxor.u32 %v1488, 2147483648
    %v1490 = vmul.f32 %v1489, 1.442695
    %v1491 = vpow.pop %v1490
    %v1492 = vadd.f32 %v1491, 1.0
    %v1493 = vrcp.pop %v1492
    %v1494 = vmul.f32 1.0, %v1493
    %v1495 = vtanh.pop %v1488
    %v1496 = vmul.f32 %v1494, %v1315
    %1498 = vrot.lane.b32.xlu0 %v1495, 64
    %v1499 = vpop.permute.xlu0 %1498
    %v1501 = vmul.f32 %v1494, %v1499
    %1503 = vrot.lane.b32.xlu0 %v1501, 32
    %v1504 = vpop.permute.xlu0 %1503
    %v1506 = vadd.f32 %v1496, %v1504
    %v1507 = vtanh.pop %v1506
    %1509 = vrot.lane.b32.xlu0 %v1507, 64
    %v1510 = vpop.permute.xlu0 %1509
    %v1512 = vmul.f32 %v1494, %v1510
    %1513 = vmatprep.subr.bf16.mxu0 0
    %1514 = vmatpush1.bf16.msra.mxu0 0
    %1515 = vmatprep.subr.bf16.mxu0 0
    %1516 = vmatpush1.bf16.msra.mxu0 0
    %1517 = vmatprep.subr.bf16.mxu0 0
    %1518 = vmatpush1.bf16.msra.mxu0 0
    %1519 = vmatprep.subr.bf16.mxu0 0
    %1520 = vmatpush1.bf16.msra.mxu0 0
    %1521 = vmatprep.subr.bf16.mxu0 0
    %1522 = vmatpush1.bf16.msra.mxu0 0
    %1523 = vmatprep.subr.bf16.mxu0 0
    %1524 = vmatpush1.bf16.msra.mxu0 0
    %1525 = vmatprep.subr.bf16.mxu0 0
    %1526 = vmatpush1.bf16.msra.mxu0 %v154
    %1527 = vmatprep.subr.bf16.mxu0 0
    %1528 = vmatpush1.bf16.msra.mxu0 %v153
    %1529 = vmatprep.subr.bf16.mxu0 0
    %1530 = vmatpush2.bf16.msra.mxu0 0
    %1531 = vmatprep.subr.bf16.mxu0 0
    %1532 = vmatpush2.bf16.msra.mxu0 0
    %1533 = vmatprep.subr.bf16.mxu0 0
    %1534 = vmatpush2.bf16.msra.mxu0 0
    %1535 = vmatprep.subr.bf16.mxu0 0
    %1536 = vmatpush2.bf16.msra.mxu0 0
    %1537 = vmatprep.subr.bf16.mxu0 0
    %1538 = vmatpush2.bf16.msra.mxu0 0
    %1539 = vmatprep.subr.bf16.mxu0 0
    %1540 = vmatpush2.bf16.msra.mxu0 0
    %1541 = vmatprep.subr.bf16.mxu0 0
    %1542 = vmatpush2.bf16.msra.mxu0 0
    %1543 = vmatprep.subr.bf16.mxu0 0
    %1544 = vmatpush2.bf16.msra.mxu0 0
    %1545 = vmatprep.mubr.bf16.mxu0 0
    %1546 = vmatmul.mubr.bf16.gmra.mxu0 %v1399
    %v1547 = vpop.f32.mrf.mxu0
    %v1548 = vadd.f32 0.0, %v1547
    %v1549 = vpop.f32.mrf.mxu0
    %v1550 = vpop.f32.mrf.mxu0
    %v1551 = vpop.f32.mrf.mxu0
    %1552 = vdwg.mxu0
    %v1554 = vrot.slane %v1548, 1
    %v1556 = vadd.f32 %v140, %v1554
    %v1557 = vxor.u32 %v1556, 2147483648
    %v1558 = vmul.f32 %v1557, 1.442695
    %v1559 = vpow.pop %v1558
    %v1560 = vadd.f32 %v1559, 1.0
    %v1561 = vrcp.pop %v1560
    %v1562 = vmul.f32 1.0, %v1561
    %v1563 = vtanh.pop %v1556
    %v1565 = vrot.slane %v1386, 7
    %v1567 = vmul.f32 %v1562, %v1565
    %1569 = vrot.lane.b32.xlu0 %v1563, 64
    %v1570 = vpop.permute.xlu0 %1569
    %v1572 = vmul.f32 %v1562, %v1570
    %1574 = vrot.lane.b32.xlu0 %v1572, 32
    %v1575 = vpop.permute.xlu0 %1574
    %v1577 = vadd.f32 %v1567, %v1575
    %v1578 = vtanh.pop %v1577
    %1580 = vrot.lane.b32.xlu0 %v1578, 64
    %v1581 = vpop.permute.xlu0 %1580
    %v1583 = vmul.f32 %v1562, %v1581
    %v1584 = vpack.c.bf16 %v1583, %v1583
    %v1586 = vshrl.u32 %v1584, 16
    %v1588 = vrot.slane %v1586, 3
    %1589 = vrot.lane.b32.xlu0 %v1588, 32
    %v1590 = vpop.permute.xlu0 %1589
    %v1592 = vsel %vm157, %v1590, 0
    %1594 = vmatprep.subr.bf16.mxu0 0
    %1595 = vmatpush1.bf16.msra.mxu0 0
    %1596 = vmatprep.subr.bf16.mxu0 0
    %1597 = vmatpush1.bf16.msra.mxu0 0
    %1598 = vmatprep.subr.bf16.mxu0 0
    %1599 = vmatpush1.bf16.msra.mxu0 0
    %1600 = vmatprep.subr.bf16.mxu0 0
    %1601 = vmatpush1.bf16.msra.mxu0 0
    %1602 = vmatprep.subr.bf16.mxu0 0
    %1603 = vmatpush1.bf16.msra.mxu0 0
    %1604 = vmatprep.subr.bf16.mxu0 0
    %1605 = vmatpush1.bf16.msra.mxu0 0
    %1606 = vmatprep.subr.bf16.mxu0 0
    %1607 = vmatpush1.bf16.msra.mxu0 %v239
    %1608 = vmatprep.subr.bf16.mxu0 0
    %1609 = vmatpush1.bf16.msra.mxu0 %v238
    %1610 = vmatprep.subr.bf16.mxu0 0
    %1611 = vmatpush2.bf16.msra.mxu0 0
    %1612 = vmatprep.subr.bf16.mxu0 0
    %1613 = vmatpush2.bf16.msra.mxu0 0
    %1614 = vmatprep.subr.bf16.mxu0 0
    %1615 = vmatpush2.bf16.msra.mxu0 0
    %1616 = vmatprep.subr.bf16.mxu0 0
    %1617 = vmatpush2.bf16.msra.mxu0 0
    %1618 = vmatprep.subr.bf16.mxu0 0
    %1619 = vmatpush2.bf16.msra.mxu0 0
    %1620 = vmatprep.subr.bf16.mxu0 0
    %1621 = vmatpush2.bf16.msra.mxu0 0
    %1622 = vmatprep.subr.bf16.mxu0 0
    %1623 = vmatpush2.bf16.msra.mxu0 0
    %1624 = vmatprep.subr.bf16.mxu0 0
    %1625 = vmatpush2.bf16.msra.mxu0 0
    %1626 = vmatprep.mubr.bf16.mxu0 0
    %1627 = vmatmul.mubr.bf16.gmra.mxu0 %v1592
    %v1628 = vpop.f32.mrf.mxu0
    %v1629 = vadd.f32 %v89, %v1628
    %v1630 = vpop.f32.mrf.mxu0
    %v1631 = vpop.f32.mrf.mxu0
    %v1632 = vpop.f32.mrf.mxu0
    %1633 = vdwg.mxu0
    %v1634 = vpack.c.bf16 %v1512, %v1512
    %1636 = vrot.lane.b32.xlu0 %v1634, 32
    %v1637 = vpop.permute.xlu0 %1636
    %v1639 = vsel %vm157, %v1637, 0
    %1641 = vmatprep.subr.bf16.mxu0 0
    %1642 = vmatpush1.bf16.msra.mxu0 0
    %1643 = vmatprep.subr.bf16.mxu0 0
    %1644 = vmatpush1.bf16.msra.mxu0 0
    %1645 = vmatprep.subr.bf16.mxu0 0
    %1646 = vmatpush1.bf16.msra.mxu0 0
    %1647 = vmatprep.subr.bf16.mxu0 0
    %1648 = vmatpush1.bf16.msra.mxu0 0
    %1649 = vmatprep.subr.bf16.mxu0 0
    %1650 = vmatpush1.bf16.msra.mxu0 0
    %1651 = vmatprep.subr.bf16.mxu0 0
    %1652 = vmatpush1.bf16.msra.mxu0 0
    %1653 = vmatprep.subr.bf16.mxu0 0
    %1654 = vmatpush1.bf16.msra.mxu0 %v294
    %1655 = vmatprep.subr.bf16.mxu0 0
    %1656 = vmatpush1.bf16.msra.mxu0 %v293
    %1657 = vmatprep.subr.bf16.mxu0 0
    %1658 = vmatpush2.bf16.msra.mxu0 0
    %1659 = vmatprep.subr.bf16.mxu0 0
    %1660 = vmatpush2.bf16.msra.mxu0 0
    %1661 = vmatprep.subr.bf16.mxu0 0
    %1662 = vmatpush2.bf16.msra.mxu0 0
    %1663 = vmatprep.subr.bf16.mxu0 0
    %1664 = vmatpush2.bf16.msra.mxu0 0
    %1665 = vmatprep.subr.bf16.mxu0 0
    %1666 = vmatpush2.bf16.msra.mxu0 0
    %1667 = vmatprep.subr.bf16.mxu0 0
    %1668 = vmatpush2.bf16.msra.mxu0 0
    %1669 = vmatprep.subr.bf16.mxu0 0
    %1670 = vmatpush2.bf16.msra.mxu0 0
    %1671 = vmatprep.subr.bf16.mxu0 0
    %1672 = vmatpush2.bf16.msra.mxu0 0
    %1673 = vmatprep.mubr.bf16.mxu0 0
    %1674 = vmatmul.mubr.bf16.gmra.mxu0 %v1639
    %v1675 = vpop.f32.mrf.mxu0
    %v1676 = vadd.f32 0.0, %v1675
    %v1677 = vpop.f32.mrf.mxu0
    %v1678 = vpop.f32.mrf.mxu0
    %v1679 = vpop.f32.mrf.mxu0
    %1680 = vdwg.mxu0
    %v1681 = vadd.f32 %v1629, %v1676
    %v1682 = vxor.u32 %v1681, 2147483648
    %v1683 = vmul.f32 %v1682, 1.442695
    %v1684 = vpow.pop %v1683
    %v1685 = vadd.f32 %v1684, 1.0
    %v1686 = vrcp.pop %v1685
    %v1687 = vmul.f32 1.0, %v1686
    %v1688 = vtanh.pop %v1681
    %v1689 = vmul.f32 %v1687, %v1506
    %1691 = vrot.lane.b32.xlu0 %v1688, 64
    %v1692 = vpop.permute.xlu0 %1691
    %v1694 = vmul.f32 %v1687, %v1692
    %1696 = vrot.lane.b32.xlu0 %v1694, 32
    %v1697 = vpop.permute.xlu0 %1696
    %v1699 = vadd.f32 %v1689, %v1697
    %v1700 = vtanh.pop %v1699
    %1702 = vrot.lane.b32.xlu0 %v1700, 64
    %v1703 = vpop.permute.xlu0 %1702
    %v1705 = vmul.f32 %v1687, %v1703
    %v1706 = vld [vmem:[%s7] sm:$0x1]
    %v1708 = vlaneseq
    %v1709 = vshrl.u32 %v1708, 7
    %v1710 = vsub.s32 0, %v1709
    %v1711 = vrot.slane %v1706, %v1710
    %1712 = vrot.lane.b32.xlu0 %v1711, 96
    %v1713 = vpop.permute.xlu0 %1712
    %v1715 = vmul.f32 %v1705, %v1713
    %1717 = vrot.lane.b32.xlu0 %v1715, 32
    %v1718 = vpop.permute.xlu0 %1717
    %vm1720 = vcmask 253952
    %v1721 = vsel %vm1720, %v1718, 0.0
    %1722 = vadd.xlane.f32.xlu0 %v1721
    %v1723 = vpop.xlane.xlu0 %1722
    %v1724 = vld [vmem:[#allocation2] sm:$0x1]
    %v1725 = vadd.f32 %v1723, %v1724
    %vm1726 = vcmask 0
    %1727 = vst.msk [vmem:[#allocation9] sm:$0x1] %vm1726, %v1725
    // Predicated region
    $region50: #{tpu_custom_call.1} parent=1 // pred_check
      _
    $region51: #{tpu_custom_call.1} parent=1 // pred_check_branch
      %1729 = sbr.rel (0) target = $region53
    $region52: #{tpu_custom_call.1} parent=1 // pred_region
      %s1731 = ssub.s32 16, 16
      %1732 = vsyncadd [#allocation5], %s1731
      %s1734 = sshll.u32 [#allocation9], 4
      %s1735 = int_to_ptr.vmem [resolvable:$true] %s1734
      %1737 = dma.vmem_to_hbm [thread:$0]  %s1735, 16, %s9, [#allocation5]
    $region53: #{tpu_custom_call.1} parent=1 // pred_fallthru
      _
    // Predicated region
    $region54: #{tpu_custom_call.1} parent=1 // pred_check
      _
    $region55: #{tpu_custom_call.1} parent=1 // pred_check_branch
      %1739 = sbr.rel (0) target = $region57
    $region56: #{tpu_custom_call.1} parent=1 // pred_region
      %1740 = dma.done [#allocation5], 16
    $region57: #{tpu_custom_call.1} parent=1 // pred_fallthru
      _
    %1741 = vsyncpa [#allocation4], 1
    %1742 = vsyncpa [#allocation7], 1
    %1743 = vsyncpa [#allocation5], 1

</llo_original>
